<compile_context>
chip_gen: v7x
topology: tpu7x:2x2x1
jax: 0.10.0
libtpu: 0.0.40
codegen_flags: <defaults>
</compile_context>

<pallas_src>
import jax
import jax.numpy as jnp
from jax import lax
from jax.experimental import pallas as pl
from jax.experimental.pallas import tpu as pltpu


# ----------------------------- model sizes ---------------------------------
B = 2                         # demo batch
N_HUMANS = 4                  # number of human agents
NODES = N_HUMANS + 1          # robot + humans = 5
NP = 8                        # nodes padded to one f32 sublane tile per graph
DS = 9                        # robot full-state dim
DH = 5                        # human observable-state dim
X_DIM = 32                    # graph embedding dim (ValueEstimator X_dim)
VALUE_DIMS = [32, 100, 100, 1]
EMB_IN = DS + DH + 2          # 16: [robot feats | human feats | robot-bias | human-bias]
MLP_W = 128                   # value-MLP widths zero-padded 100 -> 128 (lane dense)

# packed slab layouts (all row offsets multiples of 16 -> bf16 sublane aligned)
GW_ROWS = EMB_IN + 3 * X_DIM  # 112 = [w_emb(16); wa(32); w1(32); w2(32)]
MW_ROWS = X_DIM + 3 * MLP_W   # 416 = [v0(32); v1(128); v2(128); v3(128)], 128 cols
MB_ROWS = 32                  # f32 biases at rows 0, 8, 16, 24


def _relu(x):
    return jnp.maximum(x, 0.0)


def _dot(a, b):
    return jnp.dot(a, b, preferred_element_type=jnp.float32)


def _round_up(x, m):
    return ((x + m - 1) // m) * m


# ------------------------------- kernel ------------------------------------
def value_estimator_kernel(feats_ref, gw_ref, mw_ref, mb_ref, out_ref):
    rows = feats_ref.shape[0]          # bt * NP
    bt = rows // NP
    bf16 = jnp.bfloat16

    feats = feats_ref[...]             # (rows, 16) bf16, padded nodes are all-zero

    # --- packed graph weights (static, 16-aligned slices, bf16) ---
    w_emb = gw_ref[0:EMB_IN, :]                               # (16, 32), biases folded in
    wa = gw_ref[EMB_IN:EMB_IN + X_DIM, :]                     # (32, 32)
    w1 = gw_ref[EMB_IN + X_DIM:EMB_IN + 2 * X_DIM, :]         # (32, 32)
    w2 = gw_ref[EMB_IN + 2 * X_DIM:EMB_IN + 3 * X_DIM, :]     # (32, 32)

    # --- node embeddings: one fused matmul (bias via indicator lanes) ---
    Xf = _relu(_dot(feats, w_emb))                            # (rows, 32) f32; padded rows = 0
    X3 = Xf.reshape(bt, NP, X_DIM).astype(bf16)               # (bt, 8, 32)
    xw = _dot(Xf.astype(bf16), wa)                            # (rows, 32) f32
    xw3 = xw.reshape(bt, NP, X_DIM).astype(bf16)              # (bt, 8, 32)

    # --- per-graph relation scores + masked row softmax (block-diagonal) ---
    s3 = jnp.einsum('bnd,bmd->bnm', xw3, X3,
                    preferred_element_type=jnp.float32)       # (bt, 8, 8)
    valid = lax.broadcasted_iota(jnp.int32, (1, 1, NP), 2) < NODES   # key-node mask
    s3 = jnp.where(valid, s3, jnp.float32(-1e30))
    m = jnp.max(s3, axis=-1, keepdims=True)
    e = jnp.exp(s3 - m)                                        # masked lanes flush to 0
    A3 = e / jnp.sum(e, axis=-1, keepdims=True)                # (bt, 8, 8) f32
    A3_b = A3.astype(bf16)

    # --- GCN layer 1 (all nodes; feeds layer 2) ---
    agg = jnp.einsum('bnm,bmd->bnd', A3_b, X3,
                     preferred_element_type=jnp.float32)       # (bt, 8, 32) f32
    H1 = _relu(_dot(agg.reshape(rows, X_DIM).astype(bf16), w1))  # (rows, 32) f32
    H1_3 = H1.reshape(bt, NP, X_DIM).astype(bf16)

    # --- GCN layer 2: only the robot row (row 0 of A) is consumed downstream ---
    A0 = A3_b[:, 0:1, :]                                       # (bt, 1, 8)
    r_agg = jnp.einsum('bnm,bmd->bnd', A0, H1_3,
                       preferred_element_type=jnp.float32)     # (bt, 1, 32) f32
    s_repr = _dot(r_agg.reshape(bt, X_DIM).astype(bf16), w2)   # (bt, 32) == graph(state)[:, 0, :]

    # --- value MLP: 32 -> 32 -> 100 -> 100 -> 1 (zero-padded to 128 lanes) ---
    v0 = mw_ref[0:X_DIM, :]                                    # (32, 128)
    v1 = mw_ref[X_DIM:X_DIM + MLP_W, :]                        # (128, 128)
    v2 = mw_ref[X_DIM + MLP_W:X_DIM + 2 * MLP_W, :]            # (128, 128)
    v3 = mw_ref[X_DIM + 2 * MLP_W:X_DIM + 3 * MLP_W, :]        # (128, 128)
    b0 = mb_ref[0:1, :]
    b1 = mb_ref[8:9, :]
    b2 = mb_ref[16:17, :]
    b3 = mb_ref[24:25, :]

    h = _relu(_dot(s_repr.astype(bf16), v0) + b0)              # (bt, 128) f32
    h = _relu(_dot(h.astype(bf16), v1) + b1)
    h = _relu(_dot(h.astype(bf16), v2) + b2)
    out_ref[...] = _dot(h.astype(bf16), v3) + b3               # value in lane 0


# ------------------------------ host-side packing ---------------------------
def build_node_features(robot_state, human_states):
    """Pack (B,1,DS)+(B,N,DH) -> flat bf16 node features (B*NP, 16), padded to NP nodes."""
    b = robot_state.shape[0]
    robot = robot_state[:, 0, :]                               # (B, DS)
    rfeat = jnp.zeros((b, EMB_IN), jnp.float32)
    rfeat = rfeat.at[:, 0:DS].set(robot)
    rfeat = rfeat.at[:, DS + DH].set(1.0)                      # robot-bias indicator lane
    hfeat = jnp.zeros((b, N_HUMANS, EMB_IN), jnp.float32)
    hfeat = hfeat.at[:, :, DS:DS + DH].set(human_states)
    hfeat = hfeat.at[:, :, DS + DH + 1].set(1.0)               # human-bias indicator lane
    pad = jnp.zeros((b, NP - NODES, EMB_IN), jnp.float32)      # dummy nodes (masked in-kernel)
    nodes = jnp.concatenate([rfeat[:, None, :], hfeat, pad], axis=1)  # (B, NP, 16)
    return nodes.reshape(b * NP, EMB_IN).astype(jnp.bfloat16)


def pack_params(params):
    """Pack the 15 raw tensors into 3 slabs: bf16 graph weights, bf16 MLP weights, f32 MLP biases."""
    (wer, ber, weh, beh, wa, w1, w2,
     v0, b0, v1, b1, v2, b2, v3, b3) = params

    # fused node-embedding weight: rows = [wer | weh | ber | beh]
    w_emb = jnp.zeros((EMB_IN, X_DIM), jnp.float32)
    w_emb = w_emb.at[0:DS, :].set(wer)
    w_emb = w_emb.at[DS:DS + DH, :].set(weh)
    w_emb = w_emb.at[DS + DH, :].set(ber[0])
    w_emb = w_emb.at[DS + DH + 1, :].set(beh[0])
    gw = jnp.concatenate([w_emb, wa, w1, w2], axis=0).astype(jnp.bfloat16)   # (112, 32)

    def pad_to(w, rows, cols):
        out = jnp.zeros((rows, cols), jnp.float32)
        return out.at[:w.shape[0], :w.shape[1]].set(w)

    mw = jnp.concatenate([
        pad_to(v0, X_DIM, MLP_W),                              # (32, 128)
        pad_to(v1, MLP_W, MLP_W),                              # (128, 128)
        pad_to(v2, MLP_W, MLP_W),
        pad_to(v3, MLP_W, MLP_W),
    ], axis=0).astype(jnp.bfloat16)                            # (416, 128)

    mb = jnp.zeros((MB_ROWS, MLP_W), jnp.float32)
    mb = mb.at[0, :b0.shape[1]].set(b0[0])
    mb = mb.at[8, :b1.shape[1]].set(b1[0])
    mb = mb.at[16, :b2.shape[1]].set(b2[0])
    mb = mb.at[24, :b3.shape[1]].set(b3[0])
    return gw, mw, mb


def value_estimator_forward(robot_state, human_states, packed, *, batch_tile=None):
    """robot_state: (B,1,DS), human_states: (B,N,DH) -> value (B,1)."""
    b = robot_state.shape[0]
    gw, mw, mb = packed

    if batch_tile is None:
        # Linear-cost graph path: per-step cost is O(bt), so cap the tile and
        # scale via the grid (>= 2 tiles lets v7x megacore shard the batch).
        bt = min(64, _round_up(b, 8))
    else:
        assert batch_tile % 8 == 0, "batch_tile must be a multiple of 8"
        bt = batch_tile

    b_pad = _round_up(b, bt)
    num_tiles = b_pad // bt
    if b_pad != b:
        pad = b_pad - b
        robot_state = jnp.concatenate(
            [robot_state, jnp.zeros((pad, 1, DS), robot_state.dtype)], axis=0)
        human_states = jnp.concatenate(
            [human_states, jnp.zeros((pad, N_HUMANS, DH), human_states.dtype)], axis=0)

    feats = build_node_features(robot_state, human_states)     # (b_pad*NP, 16) bf16

    out = pl.pallas_call(
        value_estimator_kernel,
        out_shape=jax.ShapeDtypeStruct((b_pad, MLP_W), jnp.float32),
        grid=(num_tiles,),
        in_specs=[
            pl.BlockSpec((bt * NP, EMB_IN), lambda i: (i, 0)),   # node features
            pl.BlockSpec((GW_ROWS, X_DIM), lambda i: (0, 0)),    # graph weight slab (bf16)
            pl.BlockSpec((MW_ROWS, MLP_W), lambda i: (0, 0)),    # MLP weight slab (bf16)
            pl.BlockSpec((MB_ROWS, MLP_W), lambda i: (0, 0)),    # MLP bias slab (f32)
        ],
        out_specs=pl.BlockSpec((bt, MLP_W), lambda i: (i, 0)),
        compiler_params=pltpu.CompilerParams(
            dimension_semantics=("parallel",)),                  # v7x: 2 TCs
    )(feats, gw, mw, mb)

    return out[:b, 0:1]                                          # value lives in lane 0


def init_params(key):
    """Deterministic synthetic parameters (Kaiming-ish normal init)."""
    ks = jax.random.split(key, 16)

    def lin(k, din, dout):
        return jax.random.normal(k, (din, dout), jnp.float32) * (1.0 / jnp.sqrt(din))

    wer = lin(ks[0], DS, X_DIM)
    ber = jnp.zeros((1, X_DIM), jnp.float32)
    weh = lin(ks[1], DH, X_DIM)
    beh = jnp.zeros((1, X_DIM), jnp.float32)
    wa = lin(ks[2], X_DIM, X_DIM)
    w1 = lin(ks[3], X_DIM, X_DIM)
    w2 = lin(ks[4], X_DIM, X_DIM)

    dims = [X_DIM] + VALUE_DIMS          # 32 -> 32 -> 100 -> 100 -> 1
    v0 = lin(ks[5], dims[0], dims[1]); b0 = jnp.zeros((1, dims[1]), jnp.float32)
    v1 = lin(ks[6], dims[1], dims[2]); b1 = jnp.zeros((1, dims[2]), jnp.float32)
    v2 = lin(ks[7], dims[2], dims[3]); b2 = jnp.zeros((1, dims[3]), jnp.float32)
    v3 = lin(ks[8], dims[3], dims[4]); b3 = jnp.zeros((1, dims[4]), jnp.float32)

    return (wer, ber, weh, beh, wa, w1, w2,
            v0, b0, v1, b1, v2, b2, v3, b3)


if __name__ == "__main__":
    key = jax.random.PRNGKey(0)
    k_robot, k_human, k_params = jax.random.split(key, 3)

    # state = (robot_state, human_states), both rank-3 as asserted in forward()
    robot_state = jax.random.normal(k_robot, (B, 1, DS), jnp.float32)
    human_states = jax.random.normal(k_human, (B, N_HUMANS, DH), jnp.float32)

    params = init_params(k_params)
    packed = pack_params(params)

    value = value_estimator_forward(robot_state, human_states, packed)
    value = jax.block_until_ready(value)

    assert value.shape == (B, 1), value.shape
    assert value.dtype == jnp.float32
    assert bool(jnp.all(jnp.isfinite(value)))
    print("KERNEL_OK")
</pallas_src>

<mosaic_0001>
module attributes {stable_mosaic.version = 11 : i64} {
  func.func @value_estimator_kernel(%arg0: i32, %arg1: memref<64x16xbf16, #tpu.memory_space<vmem>>, %arg2: memref<112x32xbf16, #tpu.memory_space<vmem>>, %arg3: memref<416x128xbf16, #tpu.memory_space<vmem>>, %arg4: memref<32x128xf32, #tpu.memory_space<vmem>>, %arg5: memref<8x128xf32, #tpu.memory_space<vmem>>) attributes {dimension_semantics = [#tpu.dimension_semantics<parallel>], iteration_bounds = array<i64: 1>, scalar_prefetch = 0 : i64, scratch_operands = 0 : i64, tpu.core_type = #tpu.core_type<tc>, window_params = [{transform_indices = @transform_0, window_bounds = array<i64: 64, 16>}, {pipeline_mode = #tpu.pipeline_mode<synchronous>, transform_indices = @transform_1, window_bounds = array<i64: 112, 32>}, {pipeline_mode = #tpu.pipeline_mode<synchronous>, transform_indices = @transform_2, window_bounds = array<i64: 416, 128>}, {pipeline_mode = #tpu.pipeline_mode<synchronous>, transform_indices = @transform_3, window_bounds = array<i64: 32, 128>}, {transform_indices = @transform_4, window_bounds = array<i64: 8, 128>}]} {
    %c0 = arith.constant 0 : index
    %c0_0 = arith.constant 0 : index
    %0 = vector.load %arg1[%c0, %c0_0] : memref<64x16xbf16, #tpu.memory_space<vmem>>, vector<64x16xbf16>
    %c0_1 = arith.constant 0 : index
    %c0_2 = arith.constant 0 : index
    %1 = vector.load %arg2[%c0_1, %c0_2] : memref<112x32xbf16, #tpu.memory_space<vmem>>, vector<16x32xbf16>
    %c16 = arith.constant 16 : index
    %c0_3 = arith.constant 0 : index
    %2 = vector.load %arg2[%c16, %c0_3] : memref<112x32xbf16, #tpu.memory_space<vmem>>, vector<32x32xbf16>
    %c48 = arith.constant 48 : index
    %c0_4 = arith.constant 0 : index
    %3 = vector.load %arg2[%c48, %c0_4] : memref<112x32xbf16, #tpu.memory_space<vmem>>, vector<32x32xbf16>
    %c80 = arith.constant 80 : index
    %c0_5 = arith.constant 0 : index
    %4 = vector.load %arg2[%c80, %c0_5] : memref<112x32xbf16, #tpu.memory_space<vmem>>, vector<32x32xbf16>
    %cst = arith.constant dense<0.000000e+00> : vector<64x32xf32>
    %5 = tpu.matmul %0, %1, %cst {dimension_numbers = #tpu.dot_dimension_numbers<[1], [0], [0], [1], [0, 0, 1, 1], [], []>} : vector<64x16xbf16>, vector<16x32xbf16>, vector<64x32xf32> -> vector<64x32xf32>
    %cst_6 = arith.constant 0.000000e+00 : f32
    %6 = vector.broadcast %cst_6 : f32 to vector<64x32xf32>
    %7 = arith.maximumf %5, %6 : vector<64x32xf32>
    %8 = vector.shape_cast %7 : vector<64x32xf32> to vector<8x8x32xf32>
    %9 = arith.truncf %8 : vector<8x8x32xf32> to vector<8x8x32xbf16>
    %10 = arith.truncf %7 : vector<64x32xf32> to vector<64x32xbf16>
    %cst_7 = arith.constant dense<0.000000e+00> : vector<64x32xf32>
    %11 = tpu.matmul %10, %2, %cst_7 {dimension_numbers = #tpu.dot_dimension_numbers<[1], [0], [0], [1], [0, 0, 1, 1], [], []>} : vector<64x32xbf16>, vector<32x32xbf16>, vector<64x32xf32> -> vector<64x32xf32>
    %12 = vector.shape_cast %11 : vector<64x32xf32> to vector<8x8x32xf32>
    %13 = arith.truncf %12 : vector<8x8x32xf32> to vector<8x8x32xbf16>
    "tpu.trace_start"() <{level = 10 : i32, message = "bnd,bmd->bnm"}> : () -> ()
    %cst_8 = arith.constant dense<0.000000e+00> : vector<8x8x8xf32>
    %14 = tpu.matmul %13, %9, %cst_8 {dimension_numbers = #tpu.dot_dimension_numbers<[2], [2], [1], [1], [0, 0, 0, 1, 1, 1], [0], [0]>} : vector<8x8x32xbf16>, vector<8x8x32xbf16>, vector<8x8x8xf32> -> vector<8x8x8xf32>
    "tpu.trace_stop"() : () -> ()
    %15 = tpu.iota {dimensions = array<i32: 2>} : vector<1x1x8xi32>
    %c5_i32 = arith.constant 5 : i32
    %16 = vector.broadcast %c5_i32 : i32 to vector<1x1x8xi32>
    %17 = arith.cmpi slt, %15, %16 : vector<1x1x8xi32>
    %cst_9 = arith.constant -1.000000e+30 : f32
    %18 = vector.shape_cast %17 : vector<1x1x8xi1> to vector<1x1x8xi1>
    %19 = vector.broadcast %18 : vector<1x1x8xi1> to vector<8x8x8xi1>
    %20 = vector.broadcast %cst_9 : f32 to vector<8x8x8xf32>
    %21 = arith.select %19, %14, %20 : vector<8x8x8xi1>, vector<8x8x8xf32>
    %cst_10 = arith.constant dense<0xFF800000> : vector<8x8xf32>
    %22 = vector.multi_reduction <maximumf>, %21, %cst_10 [2] : vector<8x8x8xf32> to vector<8x8xf32>
    %23 = vector.shape_cast %22 : vector<8x8xf32> to vector<8x8x1xf32>
    %24 = vector.broadcast %23 : vector<8x8x1xf32> to vector<8x8x8xf32>
    %25 = arith.subf %21, %24 : vector<8x8x8xf32>
    %26 = math.exp %25 : vector<8x8x8xf32>
    %cst_11 = arith.constant dense<0.000000e+00> : vector<8x8xf32>
    %27 = vector.multi_reduction <add>, %26, %cst_11 [2] : vector<8x8x8xf32> to vector<8x8xf32>
    %28 = vector.shape_cast %27 : vector<8x8xf32> to vector<8x8x1xf32>
    %29 = vector.broadcast %28 : vector<8x8x1xf32> to vector<8x8x8xf32>
    %30 = arith.divf %26, %29 : vector<8x8x8xf32>
    %31 = arith.truncf %30 : vector<8x8x8xf32> to vector<8x8x8xbf16>
    "tpu.trace_start"() <{level = 10 : i32, message = "bnm,bmd->bnd"}> : () -> ()
    %cst_12 = arith.constant dense<0.000000e+00> : vector<8x8x32xf32>
    %32 = tpu.matmul %31, %9, %cst_12 {dimension_numbers = #tpu.dot_dimension_numbers<[2], [1], [1], [2], [0, 0, 0, 1, 1, 2], [0], [0]>} : vector<8x8x8xbf16>, vector<8x8x32xbf16>, vector<8x8x32xf32> -> vector<8x8x32xf32>
    "tpu.trace_stop"() : () -> ()
    %33 = vector.shape_cast %32 : vector<8x8x32xf32> to vector<64x32xf32>
    %34 = arith.truncf %33 : vector<64x32xf32> to vector<64x32xbf16>
    %cst_13 = arith.constant dense<0.000000e+00> : vector<64x32xf32>
    %35 = tpu.matmul %34, %3, %cst_13 {dimension_numbers = #tpu.dot_dimension_numbers<[1], [0], [0], [1], [0, 0, 1, 1], [], []>} : vector<64x32xbf16>, vector<32x32xbf16>, vector<64x32xf32> -> vector<64x32xf32>
    %cst_14 = arith.constant 0.000000e+00 : f32
    %36 = vector.broadcast %cst_14 : f32 to vector<64x32xf32>
    %37 = arith.maximumf %35, %36 : vector<64x32xf32>
    %38 = vector.shape_cast %37 : vector<64x32xf32> to vector<8x8x32xf32>
    %39 = arith.truncf %38 : vector<8x8x32xf32> to vector<8x8x32xbf16>
    %40 = vector.extract_strided_slice %31 {offsets = [0, 0, 0], sizes = [8, 1, 8], strides = [1, 1, 1]} : vector<8x8x8xbf16> to vector<8x1x8xbf16>
    "tpu.trace_start"() <{level = 10 : i32, message = "bnm,bmd->bnd"}> : () -> ()
    %cst_15 = arith.constant dense<0.000000e+00> : vector<8x1x32xf32>
    %41 = tpu.matmul %40, %39, %cst_15 {dimension_numbers = #tpu.dot_dimension_numbers<[2], [1], [1], [2], [0, 0, 0, 1, 1, 2], [0], [0]>} : vector<8x1x8xbf16>, vector<8x8x32xbf16>, vector<8x1x32xf32> -> vector<8x1x32xf32>
    "tpu.trace_stop"() : () -> ()
    %42 = vector.shape_cast %41 : vector<8x1x32xf32> to vector<8x32xf32>
    %43 = arith.truncf %42 : vector<8x32xf32> to vector<8x32xbf16>
    %cst_16 = arith.constant dense<0.000000e+00> : vector<8x32xf32>
    %44 = tpu.matmul %43, %4, %cst_16 {dimension_numbers = #tpu.dot_dimension_numbers<[1], [0], [0], [1], [0, 0, 1, 1], [], []>} : vector<8x32xbf16>, vector<32x32xbf16>, vector<8x32xf32> -> vector<8x32xf32>
    %c0_17 = arith.constant 0 : index
    %c0_18 = arith.constant 0 : index
    %45 = vector.load %arg3[%c0_17, %c0_18] : memref<416x128xbf16, #tpu.memory_space<vmem>>, vector<32x128xbf16>
    %c32 = arith.constant 32 : index
    %c0_19 = arith.constant 0 : index
    %46 = vector.load %arg3[%c32, %c0_19] : memref<416x128xbf16, #tpu.memory_space<vmem>>, vector<128x128xbf16>
    %c160 = arith.constant 160 : index
    %c0_20 = arith.constant 0 : index
    %47 = vector.load %arg3[%c160, %c0_20] : memref<416x128xbf16, #tpu.memory_space<vmem>>, vector<128x128xbf16>
    %c288 = arith.constant 288 : index
    %c0_21 = arith.constant 0 : index
    %48 = vector.load %arg3[%c288, %c0_21] : memref<416x128xbf16, #tpu.memory_space<vmem>>, vector<128x128xbf16>
    %c0_22 = arith.constant 0 : index
    %c0_23 = arith.constant 0 : index
    %49 = vector.load %arg4[%c0_22, %c0_23] : memref<32x128xf32, #tpu.memory_space<vmem>>, vector<1x128xf32>
    %c8 = arith.constant 8 : index
    %c0_24 = arith.constant 0 : index
    %50 = vector.load %arg4[%c8, %c0_24] : memref<32x128xf32, #tpu.memory_space<vmem>>, vector<1x128xf32>
    %c16_25 = arith.constant 16 : index
    %c0_26 = arith.constant 0 : index
    %51 = vector.load %arg4[%c16_25, %c0_26] : memref<32x128xf32, #tpu.memory_space<vmem>>, vector<1x128xf32>
    %c24 = arith.constant 24 : index
    %c0_27 = arith.constant 0 : index
    %52 = vector.load %arg4[%c24, %c0_27] : memref<32x128xf32, #tpu.memory_space<vmem>>, vector<1x128xf32>
    %53 = arith.truncf %44 : vector<8x32xf32> to vector<8x32xbf16>
    %cst_28 = arith.constant dense<0.000000e+00> : vector<8x128xf32>
    %54 = tpu.matmul %53, %45, %cst_28 {dimension_numbers = #tpu.dot_dimension_numbers<[1], [0], [0], [1], [0, 0, 1, 1], [], []>} : vector<8x32xbf16>, vector<32x128xbf16>, vector<8x128xf32> -> vector<8x128xf32>
    %55 = vector.broadcast %49 : vector<1x128xf32> to vector<8x128xf32>
    %56 = arith.addf %54, %55 : vector<8x128xf32>
    %cst_29 = arith.constant 0.000000e+00 : f32
    %57 = vector.broadcast %cst_29 : f32 to vector<8x128xf32>
    %58 = arith.maximumf %56, %57 : vector<8x128xf32>
    %59 = arith.truncf %58 : vector<8x128xf32> to vector<8x128xbf16>
    %cst_30 = arith.constant dense<0.000000e+00> : vector<8x128xf32>
    %60 = tpu.matmul %59, %46, %cst_30 {dimension_numbers = #tpu.dot_dimension_numbers<[1], [0], [0], [1], [0, 0, 1, 1], [], []>} : vector<8x128xbf16>, vector<128x128xbf16>, vector<8x128xf32> -> vector<8x128xf32>
    %61 = vector.broadcast %50 : vector<1x128xf32> to vector<8x128xf32>
    %62 = arith.addf %60, %61 : vector<8x128xf32>
    %cst_31 = arith.constant 0.000000e+00 : f32
    %63 = vector.broadcast %cst_31 : f32 to vector<8x128xf32>
    %64 = arith.maximumf %62, %63 : vector<8x128xf32>
    %65 = arith.truncf %64 : vector<8x128xf32> to vector<8x128xbf16>
    %cst_32 = arith.constant dense<0.000000e+00> : vector<8x128xf32>
    %66 = tpu.matmul %65, %47, %cst_32 {dimension_numbers = #tpu.dot_dimension_numbers<[1], [0], [0], [1], [0, 0, 1, 1], [], []>} : vector<8x128xbf16>, vector<128x128xbf16>, vector<8x128xf32> -> vector<8x128xf32>
    %67 = vector.broadcast %51 : vector<1x128xf32> to vector<8x128xf32>
    %68 = arith.addf %66, %67 : vector<8x128xf32>
    %cst_33 = arith.constant 0.000000e+00 : f32
    %69 = vector.broadcast %cst_33 : f32 to vector<8x128xf32>
    %70 = arith.maximumf %68, %69 : vector<8x128xf32>
    %71 = arith.truncf %70 : vector<8x128xf32> to vector<8x128xbf16>
    %cst_34 = arith.constant dense<0.000000e+00> : vector<8x128xf32>
    %72 = tpu.matmul %71, %48, %cst_34 {dimension_numbers = #tpu.dot_dimension_numbers<[1], [0], [0], [1], [0, 0, 1, 1], [], []>} : vector<8x128xbf16>, vector<128x128xbf16>, vector<8x128xf32> -> vector<8x128xf32>
    %73 = vector.broadcast %52 : vector<1x128xf32> to vector<8x128xf32>
    %74 = arith.addf %72, %73 : vector<8x128xf32>
    %c0_35 = arith.constant 0 : index
    %c0_36 = arith.constant 0 : index
    %75 = vector.load %arg5[%c0_35, %c0_36] : memref<8x128xf32, #tpu.memory_space<vmem>>, vector<8x128xf32>
    tpu.vector_store %arg5[%c0_35, %c0_36], %74 {strides = array<i32>} : memref<8x128xf32, #tpu.memory_space<vmem>>, vector<8x128xf32>,
    return
  }
  func.func @transform_0(%arg0: i32) -> (i32, i32) {
    %c0_i32 = arith.constant 0 : i32
    %c0_i32_0 = arith.constant 0 : i32
    return %arg0, %c0_i32 : i32, i32
  }
  func.func @transform_1(%arg0: i32) -> (i32, i32) {
    %c0_i32 = arith.constant 0 : i32
    %c0_i32_0 = arith.constant 0 : i32
    %c0_i32_1 = arith.constant 0 : i32
    return %c0_i32, %c0_i32_0 : i32, i32
  }
  func.func @transform_2(%arg0: i32) -> (i32, i32) {
    %c0_i32 = arith.constant 0 : i32
    %c0_i32_0 = arith.constant 0 : i32
    %c0_i32_1 = arith.constant 0 : i32
    return %c0_i32, %c0_i32_0 : i32, i32
  }
  func.func @transform_3(%arg0: i32) -> (i32, i32) {
    %c0_i32 = arith.constant 0 : i32
    %c0_i32_0 = arith.constant 0 : i32
    %c0_i32_1 = arith.constant 0 : i32
    return %c0_i32, %c0_i32_0 : i32, i32
  }
  func.func @transform_4(%arg0: i32) -> (i32, i32) {
    %c0_i32 = arith.constant 0 : i32
    %c0_i32_0 = arith.constant 0 : i32
    return %arg0, %c0_i32 : i32, i32
  }
}

</mosaic_0001>

<llo_original>
// kernel: tpu_custom_call.1
$region0: #{tpu_custom_call.1}
  #allocation0 [shape = 'u32[]', space=smem, size = 0x4, offset = 0x4, fixed_abs, tag = 'smem constant byte address 0x4 - core index']
  #allocation1 [shape = 'u32[144,128]{1,0:T(1,128)}', space=vmem, size = 0x12000, scoped, tag = 'internal scratch']
  %s0 = inlined_call_operand.vmem [shape: bf16[64,16], index: 0, kind: input, shape index: {}]
  %s1 = inlined_call_operand.vmem [shape: bf16[112,32], index: 1, kind: input, shape index: {}]
  %s2 = inlined_call_operand.hbm [shape: bf16[416,128], index: 2, kind: input, shape index: {}]
  %s3 = inlined_call_operand.vmem [shape: f32[32,128], index: 3, kind: input, shape index: {}]
  %s4 = inlined_call_operand.hbm [shape: f32[8,128], index: 4, kind: output, shape index: {}]
  %s5 = sld [smem:[#allocation0]]
  $region30: #{tpu_custom_call.1} parent=0
    _
  %s7 = ssub.s32 1, %s5
  %s8 = scalar_select 0, %s7, %s5
  $region1: #{tpu_custom_call.1} parent=0
    #allocation2 [shape = 'u8[106496]{0}', space=vmem, size = 0x1a000, scoped, tag = 'input window, operand 2, single buffered']
    #allocation3 [shape = 's32[1]{0}', space=sflag, size = 0x4, scoped, tag = 'scoped memory for tpu_custom_call.1']
    #allocation4 [shape = 's32[1]{0}', space=sflag, size = 0x4, scoped, tag = 'scoped memory for tpu_custom_call.1']
    #allocation5 [shape = 'u8[4096]{0}', space=vmem, size = 0x1000, scoped, tag = 'output window, operand 0, single buffered']
    %9 = vsyncpa [#allocation3], 0
    %10 = vsyncpa [#allocation4], 0
    // Predicated region
    $region2: #{tpu_custom_call.1} parent=1 // pred_check
      _
    $region3: #{tpu_custom_call.1} parent=1 // pred_check_branch
      %12 = sbr.rel (0) target = $region5
    $region4: #{tpu_custom_call.1} parent=1 // pred_region
      _
    $region5: #{tpu_custom_call.1} parent=1 // pred_fallthru
      _
    // Predicated region
    $region6: #{tpu_custom_call.1} parent=1 // pred_check
      _
    $region7: #{tpu_custom_call.1} parent=1 // pred_check_branch
      %14 = sbr.rel (0) target = $region9
    $region8: #{tpu_custom_call.1} parent=1 // pred_region
      _
    $region9: #{tpu_custom_call.1} parent=1 // pred_fallthru
      _
    // Predicated region
    $region10: #{tpu_custom_call.1} parent=1 // pred_check
      _
    $region11: #{tpu_custom_call.1} parent=1 // pred_check_branch
      %16 = sbr.rel (0) target = $region13
    $region12: #{tpu_custom_call.1} parent=1 // pred_region
      %s18 = ssub.s32 3328, 3328
      %19 = vsyncadd [#allocation3], %s18
      %s20 = sshll.u32 [#allocation2], 4
      %s21 = int_to_ptr.vmem [resolvable:$true] %s20
      %26 = dma.hbm_to_vmem [thread:$0]  %s2, 3328, %s21, [#allocation3], 64, 64, 4
    $region13: #{tpu_custom_call.1} parent=1 // pred_fallthru
      _
    // Predicated region
    $region14: #{tpu_custom_call.1} parent=1 // pred_check
      _
    $region15: #{tpu_custom_call.1} parent=1 // pred_check_branch
      %28 = sbr.rel (0) target = $region17
    $region16: #{tpu_custom_call.1} parent=1 // pred_region
      _
    $region17: #{tpu_custom_call.1} parent=1 // pred_fallthru
      _
    // Predicated region
    $region18: #{tpu_custom_call.1} parent=1 // pred_check
      _
    $region19: #{tpu_custom_call.1} parent=1 // pred_check_branch
      %30 = sbr.rel (0) target = $region21
    $region20: #{tpu_custom_call.1} parent=1 // pred_region
      %31 = dma.done [#allocation3], 3328
    $region21: #{tpu_custom_call.1} parent=1 // pred_fallthru
      _
    %v33 = vld [vmem:[%s0] sm:$0xf]
    %v34 = vld [vmem:[%s0 + $0x4] sm:$0xf]
    %v35 = vld [vmem:[%s0 + $0x8] sm:$0xf]
    %v36 = vld [vmem:[%s0 + $0xc] sm:$0xf]
    %v37 = vld [vmem:[%s0 + $0x10] sm:$0xf]
    %v38 = vld [vmem:[%s0 + $0x14] sm:$0xf]
    %v39 = vld [vmem:[%s0 + $0x18] sm:$0xf]
    %v40 = vld [vmem:[%s0 + $0x1c] sm:$0xf]
    %v41 = vld [vmem:[%s1] sm:$0xf]
    %v42 = vld [vmem:[%s1 + $0x4] sm:$0xf]
    %v43 = vld [vmem:[%s1 + $0x8] sm:$0xf]
    %v44 = vld [vmem:[%s1 + $0xc] sm:$0xf]
    %v45 = vld [vmem:[%s1 + $0x10] sm:$0xf]
    %v46 = vld [vmem:[%s1 + $0x14] sm:$0xf]
    %v47 = vld [vmem:[%s1 + $0x18] sm:$0xf]
    %v48 = vld [vmem:[%s1 + $0x1c] sm:$0xf]
    %v49 = vld [vmem:[%s1 + $0x20] sm:$0xf]
    %v50 = vld [vmem:[%s1 + $0x24] sm:$0xf]
    %v51 = vld [vmem:[%s1 + $0x28] sm:$0xf]
    %v52 = vld [vmem:[%s1 + $0x2c] sm:$0xf]
    %v53 = vld [vmem:[%s1 + $0x30] sm:$0xf]
    %v54 = vld [vmem:[%s1 + $0x34] sm:$0xf]
    %v63 = vunpack.c.l.b16 %v33
    %v64 = vunpack.c.l.b16 %v34
    %v65 = vunpack.c.l.b16 %v35
    %v66 = vunpack.c.l.b16 %v36
    %v67 = vunpack.c.l.b16 %v37
    %v68 = vunpack.c.l.b16 %v38
    %v69 = vunpack.c.l.b16 %v39
    %v70 = vunpack.c.l.b16 %v40
    %v71 = vpack.c.b16 %v64, %v63
    %v72 = vpack.c.b16 %v66, %v65
    %v73 = vpack.c.b16 %v68, %v67
    %v74 = vpack.c.b16 %v70, %v69
    %v77 = vunpack.c.l.b16 %v41
    %v78 = vunpack.c.l.b16 %v42
    %v79 = vpack.c.b16 %v78, %v77
    %vm81 = vcmask 130048
    %v83 = vsel %vm81, %v71, 0
    %v86 = vsel %vm81, %v72, 0
    %v89 = vsel %vm81, %v73, 0
    %v92 = vsel %vm81, %v74, 0
    %94 = vmatprep.subr.bf16.mxu0 0
    %95 = vmatpush1.bf16.msra.mxu0 %v79
    %96 = vmatprep.subr.bf16.mxu0 0
    %97 = vmatpush1.bf16.msra.mxu0 0
    %98 = vmatprep.subr.bf16.mxu0 0
    %99 = vmatpush1.bf16.msra.mxu0 0
    %100 = vmatprep.subr.bf16.mxu0 0
    %101 = vmatpush1.bf16.msra.mxu0 0
    %102 = vmatprep.subr.bf16.mxu0 0
    %103 = vmatpush1.bf16.msra.mxu0 0
    %104 = vmatprep.subr.bf16.mxu0 0
    %105 = vmatpush1.bf16.msra.mxu0 0
    %106 = vmatprep.subr.bf16.mxu0 0
    %107 = vmatpush1.bf16.msra.mxu0 0
    %108 = vmatprep.subr.bf16.mxu0 0
    %109 = vmatpush1.bf16.msra.mxu0 0
    %110 = vmatprep.subr.bf16.mxu0 0
    %111 = vmatpush1.bf16.msra.mxu0 0
    %112 = vmatprep.subr.bf16.mxu0 0
    %113 = vmatpush1.bf16.msra.mxu0 0
    %114 = vmatprep.subr.bf16.mxu0 0
    %115 = vmatpush1.bf16.msra.mxu0 0
    %116 = vmatprep.subr.bf16.mxu0 0
    %117 = vmatpush1.bf16.msra.mxu0 0
    %118 = vmatprep.subr.bf16.mxu0 0
    %119 = vmatpush1.bf16.msra.mxu0 0
    %120 = vmatprep.subr.bf16.mxu0 0
    %121 = vmatpush1.bf16.msra.mxu0 0
    %122 = vmatprep.subr.bf16.mxu0 0
    %123 = vmatpush1.bf16.msra.mxu0 0
    %124 = vmatprep.subr.bf16.mxu0 0
    %125 = vmatpush1.bf16.msra.mxu0 0
    %126 = vmatprep.mubr.bf16.mxu0 0
    %127 = vmatmul.mubr.bf16.gmra.mrb[0].mxu0 %v83
    %v128 = vpop.f32.mrb[0].mxu0
    %v129 = vadd.f32 0.0, %v128
    %v130 = vpop.f32.mrb[0].mxu0
    %v131 = vpop.f32.mrb[0].mxu0
    %v132 = vadd.f32 0.0, %v131
    %v133 = vpop.f32.mrb[0].mxu0
    %134 = vmatprep.mubr.bf16.mxu0 0
    %135 = vmatmul.mubr.bf16.gmra.mrb[0].mxu0 %v86
    %v136 = vpop.f32.mrb[0].mxu0
    %v137 = vadd.f32 0.0, %v136
    %v138 = vpop.f32.mrb[0].mxu0
    %v139 = vpop.f32.mrb[0].mxu0
    %v140 = vadd.f32 0.0, %v139
    %v141 = vpop.f32.mrb[0].mxu0
    %142 = vmatprep.mubr.bf16.mxu0 0
    %143 = vmatmul.mubr.bf16.gmra.mrb[0].mxu0 %v89
    %v144 = vpop.f32.mrb[0].mxu0
    %v145 = vadd.f32 0.0, %v144
    %v146 = vpop.f32.mrb[0].mxu0
    %v147 = vpop.f32.mrb[0].mxu0
    %v148 = vadd.f32 0.0, %v147
    %v149 = vpop.f32.mrb[0].mxu0
    %150 = vmatprep.mubr.bf16.mxu0 0
    %151 = vmatmul.mubr.bf16.gmra.mrb[0].mxu0 %v92
    %v152 = vpop.f32.mrb[0].mxu0
    %v153 = vadd.f32 0.0, %v152
    %v154 = vpop.f32.mrb[0].mxu0
    %v155 = vpop.f32.mrb[0].mxu0
    %v156 = vadd.f32 0.0, %v155
    %v157 = vpop.f32.mrb[0].mxu0
    %158 = vdwg.mxu0
    %v159 = vmax.f32 %v129, 0.0
    %v160 = vmax.f32 %v132, 0.0
    %v161 = vmax.f32 %v137, 0.0
    %v162 = vmax.f32 %v140, 0.0
    %v163 = vmax.f32 %v145, 0.0
    %v164 = vmax.f32 %v148, 0.0
    %v165 = vmax.f32 %v153, 0.0
    %v166 = vmax.f32 %v156, 0.0
    %v167 = vpack.c.bf16 %v159, %v159
    %v168 = vpack.c.bf16 %v160, %v160
    %v169 = vpack.c.bf16 %v161, %v161
    %v170 = vpack.c.bf16 %v162, %v162
    %v171 = vpack.c.bf16 %v163, %v163
    %v172 = vpack.c.bf16 %v164, %v164
    %v173 = vpack.c.bf16 %v165, %v165
    %v174 = vpack.c.bf16 %v166, %v166
    %v175 = vpack.c.bf16 %v160, %v159
    %v176 = vpack.c.bf16 %v162, %v161
    %v177 = vpack.c.bf16 %v164, %v163
    %v178 = vpack.c.bf16 %v166, %v165
    %v183 = vunpack.c.l.b16 %v43
    %v184 = vunpack.c.l.b16 %v44
    %v185 = vunpack.c.l.b16 %v45
    %v186 = vunpack.c.l.b16 %v46
    %v187 = vpack.c.b16 %v184, %v183
    %v188 = vpack.c.b16 %v186, %v185
    %vm191 = vcmask 261120
    %v193 = vsel %vm191, %v175, 0
    %v196 = vsel %vm191, %v176, 0
    %v199 = vsel %vm191, %v177, 0
    %v202 = vsel %vm191, %v178, 0
    %204 = vmatprep.subr.bf16.mxu0 0
    %205 = vmatpush1.bf16.msra.mxu0 %v187
    %206 = vmatprep.subr.bf16.mxu0 0
    %207 = vmatpush1.bf16.msra.mxu0 %v188
    %208 = vmatprep.subr.bf16.mxu0 0
    %209 = vmatpush1.bf16.msra.mxu0 0
    %210 = vmatprep.subr.bf16.mxu0 0
    %211 = vmatpush1.bf16.msra.mxu0 0
    %212 = vmatprep.subr.bf16.mxu0 0
    %213 = vmatpush1.bf16.msra.mxu0 0
    %214 = vmatprep.subr.bf16.mxu0 0
    %215 = vmatpush1.bf16.msra.mxu0 0
    %216 = vmatprep.subr.bf16.mxu0 0
    %217 = vmatpush1.bf16.msra.mxu0 0
    %218 = vmatprep.subr.bf16.mxu0 0
    %219 = vmatpush1.bf16.msra.mxu0 0
    %220 = vmatprep.subr.bf16.mxu0 0
    %221 = vmatpush1.bf16.msra.mxu0 0
    %222 = vmatprep.subr.bf16.mxu0 0
    %223 = vmatpush1.bf16.msra.mxu0 0
    %224 = vmatprep.subr.bf16.mxu0 0
    %225 = vmatpush1.bf16.msra.mxu0 0
    %226 = vmatprep.subr.bf16.mxu0 0
    %227 = vmatpush1.bf16.msra.mxu0 0
    %228 = vmatprep.subr.bf16.mxu0 0
    %229 = vmatpush1.bf16.msra.mxu0 0
    %230 = vmatprep.subr.bf16.mxu0 0
    %231 = vmatpush1.bf16.msra.mxu0 0
    %232 = vmatprep.subr.bf16.mxu0 0
    %233 = vmatpush1.bf16.msra.mxu0 0
    %234 = vmatprep.subr.bf16.mxu0 0
    %235 = vmatpush1.bf16.msra.mxu0 0
    %236 = vmatprep.mubr.bf16.mxu0 0
    %237 = vmatmul.mubr.bf16.gmra.mrb[0].mxu0 %v193
    %v238 = vpop.f32.mrb[0].mxu0
    %v239 = vadd.f32 0.0, %v238
    %v240 = vpop.f32.mrb[0].mxu0
    %v241 = vpop.f32.mrb[0].mxu0
    %v242 = vadd.f32 0.0, %v241
    %v243 = vpop.f32.mrb[0].mxu0
    %244 = vmatprep.mubr.bf16.mxu0 0
    %245 = vmatmul.mubr.bf16.gmra.mrb[0].mxu0 %v196
    %v246 = vpop.f32.mrb[0].mxu0
    %v247 = vadd.f32 0.0, %v246
    %v248 = vpop.f32.mrb[0].mxu0
    %v249 = vpop.f32.mrb[0].mxu0
    %v250 = vadd.f32 0.0, %v249
    %v251 = vpop.f32.mrb[0].mxu0
    %252 = vmatprep.mubr.bf16.mxu0 0
    %253 = vmatmul.mubr.bf16.gmra.mrb[0].mxu0 %v199
    %v254 = vpop.f32.mrb[0].mxu0
    %v255 = vadd.f32 0.0, %v254
    %v256 = vpop.f32.mrb[0].mxu0
    %v257 = vpop.f32.mrb[0].mxu0
    %v258 = vadd.f32 0.0, %v257
    %v259 = vpop.f32.mrb[0].mxu0
    %260 = vmatprep.mubr.bf16.mxu0 0
    %261 = vmatmul.mubr.bf16.gmra.mrb[0].mxu0 %v202
    %v262 = vpop.f32.mrb[0].mxu0
    %v263 = vadd.f32 0.0, %v262
    %v264 = vpop.f32.mrb[0].mxu0
    %v265 = vpop.f32.mrb[0].mxu0
    %v266 = vadd.f32 0.0, %v265
    %v267 = vpop.f32.mrb[0].mxu0
    %268 = vdwg.mxu0
    %v269 = vpack.c.bf16 %v239, %v239
    %v270 = vpack.c.bf16 %v242, %v242
    %v271 = vpack.c.bf16 %v247, %v247
    %v272 = vpack.c.bf16 %v250, %v250
    %v273 = vpack.c.bf16 %v255, %v255
    %v274 = vpack.c.bf16 %v258, %v258
    %v275 = vpack.c.bf16 %v263, %v263
    %v276 = vpack.c.bf16 %v266, %v266
    %v278 = vsel %vm191, %v269, 0
    %v281 = vsel %vm191, %v167, 0
    %283 = vmatprep.subr.bf16.mxu0 0
    %284 = vmatpush1.bf16.xpose.msra.mxu0 %v281
    %285 = vmatprep.subr.bf16.mxu0 0
    %286 = vmatpush1.bf16.xpose.msra.mxu0 0
    %287 = vmatprep.subr.bf16.mxu0 0
    %288 = vmatpush1.bf16.xpose.msra.mxu0 0
    %289 = vmatprep.subr.bf16.mxu0 0
    %290 = vmatpush1.bf16.xpose.msra.mxu0 0
    %291 = vmatprep.subr.bf16.mxu0 0
    %292 = vmatpush1.bf16.xpose.msra.mxu0 0
    %293 = vmatprep.subr.bf16.mxu0 0
    %294 = vmatpush1.bf16.xpose.msra.mxu0 0
    %295 = vmatprep.subr.bf16.mxu0 0
    %296 = vmatpush1.bf16.xpose.msra.mxu0 0
    %297 = vmatprep.subr.bf16.mxu0 0
    %298 = vmatpush1.bf16.xpose.msra.mxu0 0
    %299 = vmatprep.subr.bf16.mxu0 0
    %300 = vmatpush1.bf16.xpose.msra.mxu0 0
    %301 = vmatprep.subr.bf16.mxu0 0
    %302 = vmatpush1.bf16.xpose.msra.mxu0 0
    %303 = vmatprep.subr.bf16.mxu0 0
    %304 = vmatpush1.bf16.xpose.msra.mxu0 0
    %305 = vmatprep.subr.bf16.mxu0 0
    %306 = vmatpush1.bf16.xpose.msra.mxu0 0
    %307 = vmatprep.subr.bf16.mxu0 0
    %308 = vmatpush1.bf16.xpose.msra.mxu0 0
    %309 = vmatprep.subr.bf16.mxu0 0
    %310 = vmatpush1.bf16.xpose.msra.mxu0 0
    %311 = vmatprep.subr.bf16.mxu0 0
    %312 = vmatpush1.bf16.xpose.msra.mxu0 0
    %313 = vmatprep.subr.bf16.mxu0 0
    %314 = vmatpush1.bf16.xpose.msra.mxu0 0
    %315 = vmatprep.mubr.bf16.mxu0 0
    %316 = vmatmul.mubr.bf16.gmra.mrb[0].mxu0 %v278
    %v317 = vpop.f32.mrb[0].mxu0
    %v318 = vadd.f32 0.0, %v317
    %v319 = vpop.f32.mrb[0].mxu0
    %v320 = vpop.f32.mrb[0].mxu0
    %v321 = vpop.f32.mrb[0].mxu0
    %322 = vdwg.mxu0
    %v324 = vsel %vm191, %v270, 0
    %v327 = vsel %vm191, %v168, 0
    %329 = vmatprep.subr.bf16.mxu0 0
    %330 = vmatpush1.bf16.xpose.msra.mxu0 %v327
    %331 = vmatprep.subr.bf16.mxu0 0
    %332 = vmatpush1.bf16.xpose.msra.mxu0 0
    %333 = vmatprep.subr.bf16.mxu0 0
    %334 = vmatpush1.bf16.xpose.msra.mxu0 0
    %335 = vmatprep.subr.bf16.mxu0 0
    %336 = vmatpush1.bf16.xpose.msra.mxu0 0
    %337 = vmatprep.subr.bf16.mxu0 0
    %338 = vmatpush1.bf16.xpose.msra.mxu0 0
    %339 = vmatprep.subr.bf16.mxu0 0
    %340 = vmatpush1.bf16.xpose.msra.mxu0 0
    %341 = vmatprep.subr.bf16.mxu0 0
    %342 = vmatpush1.bf16.xpose.msra.mxu0 0
    %343 = vmatprep.subr.bf16.mxu0 0
    %344 = vmatpush1.bf16.xpose.msra.mxu0 0
    %345 = vmatprep.subr.bf16.mxu0 0
    %346 = vmatpush1.bf16.xpose.msra.mxu0 0
    %347 = vmatprep.subr.bf16.mxu0 0
    %348 = vmatpush1.bf16.xpose.msra.mxu0 0
    %349 = vmatprep.subr.bf16.mxu0 0
    %350 = vmatpush1.bf16.xpose.msra.mxu0 0
    %351 = vmatprep.subr.bf16.mxu0 0
    %352 = vmatpush1.bf16.xpose.msra.mxu0 0
    %353 = vmatprep.subr.bf16.mxu0 0
    %354 = vmatpush1.bf16.xpose.msra.mxu0 0
    %355 = vmatprep.subr.bf16.mxu0 0
    %356 = vmatpush1.bf16.xpose.msra.mxu0 0
    %357 = vmatprep.subr.bf16.mxu0 0
    %358 = vmatpush1.bf16.xpose.msra.mxu0 0
    %359 = vmatprep.subr.bf16.mxu0 0
    %360 = vmatpush1.bf16.xpose.msra.mxu0 0
    %361 = vmatprep.mubr.bf16.mxu0 0
    %362 = vmatmul.mubr.bf16.gmra.mrb[0].mxu0 %v324
    %v363 = vpop.f32.mrb[0].mxu0
    %v364 = vadd.f32 0.0, %v363
    %v365 = vpop.f32.mrb[0].mxu0
    %v366 = vpop.f32.mrb[0].mxu0
    %v367 = vpop.f32.mrb[0].mxu0
    %368 = vdwg.mxu0
    %v370 = vsel %vm191, %v271, 0
    %v373 = vsel %vm191, %v169, 0
    %375 = vmatprep.subr.bf16.mxu0 0
    %376 = vmatpush1.bf16.xpose.msra.mxu0 %v373
    %377 = vmatprep.subr.bf16.mxu0 0
    %378 = vmatpush1.bf16.xpose.msra.mxu0 0
    %379 = vmatprep.subr.bf16.mxu0 0
    %380 = vmatpush1.bf16.xpose.msra.mxu0 0
    %381 = vmatprep.subr.bf16.mxu0 0
    %382 = vmatpush1.bf16.xpose.msra.mxu0 0
    %383 = vmatprep.subr.bf16.mxu0 0
    %384 = vmatpush1.bf16.xpose.msra.mxu0 0
    %385 = vmatprep.subr.bf16.mxu0 0
    %386 = vmatpush1.bf16.xpose.msra.mxu0 0
    %387 = vmatprep.subr.bf16.mxu0 0
    %388 = vmatpush1.bf16.xpose.msra.mxu0 0
    %389 = vmatprep.subr.bf16.mxu0 0
    %390 = vmatpush1.bf16.xpose.msra.mxu0 0
    %391 = vmatprep.subr.bf16.mxu0 0
    %392 = vmatpush1.bf16.xpose.msra.mxu0 0
    %393 = vmatprep.subr.bf16.mxu0 0
    %394 = vmatpush1.bf16.xpose.msra.mxu0 0
    %395 = vmatprep.subr.bf16.mxu0 0
    %396 = vmatpush1.bf16.xpose.msra.mxu0 0
    %397 = vmatprep.subr.bf16.mxu0 0
    %398 = vmatpush1.bf16.xpose.msra.mxu0 0
    %399 = vmatprep.subr.bf16.mxu0 0
    %400 = vmatpush1.bf16.xpose.msra.mxu0 0
    %401 = vmatprep.subr.bf16.mxu0 0
    %402 = vmatpush1.bf16.xpose.msra.mxu0 0
    %403 = vmatprep.subr.bf16.mxu0 0
    %404 = vmatpush1.bf16.xpose.msra.mxu0 0
    %405 = vmatprep.subr.bf16.mxu0 0
    %406 = vmatpush1.bf16.xpose.msra.mxu0 0
    %407 = vmatprep.mubr.bf16.mxu0 0
    %408 = vmatmul.mubr.bf16.gmra.mrb[0].mxu0 %v370
    %v409 = vpop.f32.mrb[0].mxu0
    %v410 = vadd.f32 0.0, %v409
    %v411 = vpop.f32.mrb[0].mxu0
    %v412 = vpop.f32.mrb[0].mxu0
    %v413 = vpop.f32.mrb[0].mxu0
    %414 = vdwg.mxu0
    %v416 = vsel %vm191, %v272, 0
    %v419 = vsel %vm191, %v170, 0
    %421 = vmatprep.subr.bf16.mxu0 0
    %422 = vmatpush1.bf16.xpose.msra.mxu0 %v419
    %423 = vmatprep.subr.bf16.mxu0 0
    %424 = vmatpush1.bf16.xpose.msra.mxu0 0
    %425 = vmatprep.subr.bf16.mxu0 0
    %426 = vmatpush1.bf16.xpose.msra.mxu0 0
    %427 = vmatprep.subr.bf16.mxu0 0
    %428 = vmatpush1.bf16.xpose.msra.mxu0 0
    %429 = vmatprep.subr.bf16.mxu0 0
    %430 = vmatpush1.bf16.xpose.msra.mxu0 0
    %431 = vmatprep.subr.bf16.mxu0 0
    %432 = vmatpush1.bf16.xpose.msra.mxu0 0
    %433 = vmatprep.subr.bf16.mxu0 0
    %434 = vmatpush1.bf16.xpose.msra.mxu0 0
    %435 = vmatprep.subr.bf16.mxu0 0
    %436 = vmatpush1.bf16.xpose.msra.mxu0 0
    %437 = vmatprep.subr.bf16.mxu0 0
    %438 = vmatpush1.bf16.xpose.msra.mxu0 0
    %439 = vmatprep.subr.bf16.mxu0 0
    %440 = vmatpush1.bf16.xpose.msra.mxu0 0
    %441 = vmatprep.subr.bf16.mxu0 0
    %442 = vmatpush1.bf16.xpose.msra.mxu0 0
    %443 = vmatprep.subr.bf16.mxu0 0
    %444 = vmatpush1.bf16.xpose.msra.mxu0 0
    %445 = vmatprep.subr.bf16.mxu0 0
    %446 = vmatpush1.bf16.xpose.msra.mxu0 0
    %447 = vmatprep.subr.bf16.mxu0 0
    %448 = vmatpush1.bf16.xpose.msra.mxu0 0
    %449 = vmatprep.subr.bf16.mxu0 0
    %450 = vmatpush1.bf16.xpose.msra.mxu0 0
    %451 = vmatprep.subr.bf16.mxu0 0
    %452 = vmatpush1.bf16.xpose.msra.mxu0 0
    %453 = vmatprep.mubr.bf16.mxu0 0
    %454 = vmatmul.mubr.bf16.gmra.mrb[0].mxu0 %v416
    %v455 = vpop.f32.mrb[0].mxu0
    %v456 = vadd.f32 0.0, %v455
    %v457 = vpop.f32.mrb[0].mxu0
    %v458 = vpop.f32.mrb[0].mxu0
    %v459 = vpop.f32.mrb[0].mxu0
    %460 = vdwg.mxu0
    %v462 = vsel %vm191, %v273, 0
    %v465 = vsel %vm191, %v171, 0
    %467 = vmatprep.subr.bf16.mxu0 0
    %468 = vmatpush1.bf16.xpose.msra.mxu0 %v465
    %469 = vmatprep.subr.bf16.mxu0 0
    %470 = vmatpush1.bf16.xpose.msra.mxu0 0
    %471 = vmatprep.subr.bf16.mxu0 0
    %472 = vmatpush1.bf16.xpose.msra.mxu0 0
    %473 = vmatprep.subr.bf16.mxu0 0
    %474 = vmatpush1.bf16.xpose.msra.mxu0 0
    %475 = vmatprep.subr.bf16.mxu0 0
    %476 = vmatpush1.bf16.xpose.msra.mxu0 0
    %477 = vmatprep.subr.bf16.mxu0 0
    %478 = vmatpush1.bf16.xpose.msra.mxu0 0
    %479 = vmatprep.subr.bf16.mxu0 0
    %480 = vmatpush1.bf16.xpose.msra.mxu0 0
    %481 = vmatprep.subr.bf16.mxu0 0
    %482 = vmatpush1.bf16.xpose.msra.mxu0 0
    %483 = vmatprep.subr.bf16.mxu0 0
    %484 = vmatpush1.bf16.xpose.msra.mxu0 0
    %485 = vmatprep.subr.bf16.mxu0 0
    %486 = vmatpush1.bf16.xpose.msra.mxu0 0
    %487 = vmatprep.subr.bf16.mxu0 0
    %488 = vmatpush1.bf16.xpose.msra.mxu0 0
    %489 = vmatprep.subr.bf16.mxu0 0
    %490 = vmatpush1.bf16.xpose.msra.mxu0 0
    %491 = vmatprep.subr.bf16.mxu0 0
    %492 = vmatpush1.bf16.xpose.msra.mxu0 0
    %493 = vmatprep.subr.bf16.mxu0 0
    %494 = vmatpush1.bf16.xpose.msra.mxu0 0
    %495 = vmatprep.subr.bf16.mxu0 0
    %496 = vmatpush1.bf16.xpose.msra.mxu0 0
    %497 = vmatprep.subr.bf16.mxu0 0
    %498 = vmatpush1.bf16.xpose.msra.mxu0 0
    %499 = vmatprep.mubr.bf16.mxu0 0
    %500 = vmatmul.mubr.bf16.gmra.mrb[0].mxu0 %v462
    %v501 = vpop.f32.mrb[0].mxu0
    %v502 = vadd.f32 0.0, %v501
    %v503 = vpop.f32.mrb[0].mxu0
    %v504 = vpop.f32.mrb[0].mxu0
    %v505 = vpop.f32.mrb[0].mxu0
    %506 = vdwg.mxu0
    %v508 = vsel %vm191, %v274, 0
    %v511 = vsel %vm191, %v172, 0
    %513 = vmatprep.subr.bf16.mxu0 0
    %514 = vmatpush1.bf16.xpose.msra.mxu0 %v511
    %515 = vmatprep.subr.bf16.mxu0 0
    %516 = vmatpush1.bf16.xpose.msra.mxu0 0
    %517 = vmatprep.subr.bf16.mxu0 0
    %518 = vmatpush1.bf16.xpose.msra.mxu0 0
    %519 = vmatprep.subr.bf16.mxu0 0
    %520 = vmatpush1.bf16.xpose.msra.mxu0 0
    %521 = vmatprep.subr.bf16.mxu0 0
    %522 = vmatpush1.bf16.xpose.msra.mxu0 0
    %523 = vmatprep.subr.bf16.mxu0 0
    %524 = vmatpush1.bf16.xpose.msra.mxu0 0
    %525 = vmatprep.subr.bf16.mxu0 0
    %526 = vmatpush1.bf16.xpose.msra.mxu0 0
    %527 = vmatprep.subr.bf16.mxu0 0
    %528 = vmatpush1.bf16.xpose.msra.mxu0 0
    %529 = vmatprep.subr.bf16.mxu0 0
    %530 = vmatpush1.bf16.xpose.msra.mxu0 0
    %531 = vmatprep.subr.bf16.mxu0 0
    %532 = vmatpush1.bf16.xpose.msra.mxu0 0
    %533 = vmatprep.subr.bf16.mxu0 0
    %534 = vmatpush1.bf16.xpose.msra.mxu0 0
    %535 = vmatprep.subr.bf16.mxu0 0
    %536 = vmatpush1.bf16.xpose.msra.mxu0 0
    %537 = vmatprep.subr.bf16.mxu0 0
    %538 = vmatpush1.bf16.xpose.msra.mxu0 0
    %539 = vmatprep.subr.bf16.mxu0 0
    %540 = vmatpush1.bf16.xpose.msra.mxu0 0
    %541 = vmatprep.subr.bf16.mxu0 0
    %542 = vmatpush1.bf16.xpose.msra.mxu0 0
    %543 = vmatprep.subr.bf16.mxu0 0
    %544 = vmatpush1.bf16.xpose.msra.mxu0 0
    %545 = vmatprep.mubr.bf16.mxu0 0
    %546 = vmatmul.mubr.bf16.gmra.mrb[0].mxu0 %v508
    %v547 = vpop.f32.mrb[0].mxu0
    %v548 = vadd.f32 0.0, %v547
    %v549 = vpop.f32.mrb[0].mxu0
    %v550 = vpop.f32.mrb[0].mxu0
    %v551 = vpop.f32.mrb[0].mxu0
    %552 = vdwg.mxu0
    %v554 = vsel %vm191, %v275, 0
    %v557 = vsel %vm191, %v173, 0
    %559 = vmatprep.subr.bf16.mxu0 0
    %560 = vmatpush1.bf16.xpose.msra.mxu0 %v557
    %561 = vmatprep.subr.bf16.mxu0 0
    %562 = vmatpush1.bf16.xpose.msra.mxu0 0
    %563 = vmatprep.subr.bf16.mxu0 0
    %564 = vmatpush1.bf16.xpose.msra.mxu0 0
    %565 = vmatprep.subr.bf16.mxu0 0
    %566 = vmatpush1.bf16.xpose.msra.mxu0 0
    %567 = vmatprep.subr.bf16.mxu0 0
    %568 = vmatpush1.bf16.xpose.msra.mxu0 0
    %569 = vmatprep.subr.bf16.mxu0 0
    %570 = vmatpush1.bf16.xpose.msra.mxu0 0
    %571 = vmatprep.subr.bf16.mxu0 0
    %572 = vmatpush1.bf16.xpose.msra.mxu0 0
    %573 = vmatprep.subr.bf16.mxu0 0
    %574 = vmatpush1.bf16.xpose.msra.mxu0 0
    %575 = vmatprep.subr.bf16.mxu0 0
    %576 = vmatpush1.bf16.xpose.msra.mxu0 0
    %577 = vmatprep.subr.bf16.mxu0 0
    %578 = vmatpush1.bf16.xpose.msra.mxu0 0
    %579 = vmatprep.subr.bf16.mxu0 0
    %580 = vmatpush1.bf16.xpose.msra.mxu0 0
    %581 = vmatprep.subr.bf16.mxu0 0
    %582 = vmatpush1.bf16.xpose.msra.mxu0 0
    %583 = vmatprep.subr.bf16.mxu0 0
    %584 = vmatpush1.bf16.xpose.msra.mxu0 0
    %585 = vmatprep.subr.bf16.mxu0 0
    %586 = vmatpush1.bf16.xpose.msra.mxu0 0
    %587 = vmatprep.subr.bf16.mxu0 0
    %588 = vmatpush1.bf16.xpose.msra.mxu0 0
    %589 = vmatprep.subr.bf16.mxu0 0
    %590 = vmatpush1.bf16.xpose.msra.mxu0 0
    %591 = vmatprep.mubr.bf16.mxu0 0
    %592 = vmatmul.mubr.bf16.gmra.mrb[0].mxu0 %v554
    %v593 = vpop.f32.mrb[0].mxu0
    %v594 = vadd.f32 0.0, %v593
    %v595 = vpop.f32.mrb[0].mxu0
    %v596 = vpop.f32.mrb[0].mxu0
    %v597 = vpop.f32.mrb[0].mxu0
    %598 = vdwg.mxu0
    %v600 = vsel %vm191, %v276, 0
    %v603 = vsel %vm191, %v174, 0
    %605 = vmatprep.subr.bf16.mxu0 0
    %606 = vmatpush1.bf16.xpose.msra.mxu0 %v603
    %607 = vmatprep.subr.bf16.mxu0 0
    %608 = vmatpush1.bf16.xpose.msra.mxu0 0
    %609 = vmatprep.subr.bf16.mxu0 0
    %610 = vmatpush1.bf16.xpose.msra.mxu0 0
    %611 = vmatprep.subr.bf16.mxu0 0
    %612 = vmatpush1.bf16.xpose.msra.mxu0 0
    %613 = vmatprep.subr.bf16.mxu0 0
    %614 = vmatpush1.bf16.xpose.msra.mxu0 0
    %615 = vmatprep.subr.bf16.mxu0 0
    %616 = vmatpush1.bf16.xpose.msra.mxu0 0
    %617 = vmatprep.subr.bf16.mxu0 0
    %618 = vmatpush1.bf16.xpose.msra.mxu0 0
    %619 = vmatprep.subr.bf16.mxu0 0
    %620 = vmatpush1.bf16.xpose.msra.mxu0 0
    %621 = vmatprep.subr.bf16.mxu0 0
    %622 = vmatpush1.bf16.xpose.msra.mxu0 0
    %623 = vmatprep.subr.bf16.mxu0 0
    %624 = vmatpush1.bf16.xpose.msra.mxu0 0
    %625 = vmatprep.subr.bf16.mxu0 0
    %626 = vmatpush1.bf16.xpose.msra.mxu0 0
    %627 = vmatprep.subr.bf16.mxu0 0
    %628 = vmatpush1.bf16.xpose.msra.mxu0 0
    %629 = vmatprep.subr.bf16.mxu0 0
    %630 = vmatpush1.bf16.xpose.msra.mxu0 0
    %631 = vmatprep.subr.bf16.mxu0 0
    %632 = vmatpush1.bf16.xpose.msra.mxu0 0
    %633 = vmatprep.subr.bf16.mxu0 0
    %634 = vmatpush1.bf16.xpose.msra.mxu0 0
    %635 = vmatprep.subr.bf16.mxu0 0
    %636 = vmatpush1.bf16.xpose.msra.mxu0 0
    %637 = vmatprep.mubr.bf16.mxu0 0
    %638 = vmatmul.mubr.bf16.gmra.mrb[0].mxu0 %v600
    %v639 = vpop.f32.mrb[0].mxu0
    %v640 = vadd.f32 0.0, %v639
    %v641 = vpop.f32.mrb[0].mxu0
    %v642 = vpop.f32.mrb[0].mxu0
    %v643 = vpop.f32.mrb[0].mxu0
    %644 = vdwg.mxu0
    %v645 = vlaneseq
    %v646 = vand.u32 %v645, 127
    %vm647 = vcmp.lt.s32.totalorder %v646, 5
    %v648 = vsel %vm647, 1, 0
    %vm649 = vcmp.eq.s32.totalorder %v648, 1
    %v650 = vsel %vm649, %v318, -1e+30
    %v651 = vsel %vm649, %v364, -1e+30
    %v652 = vsel %vm649, %v410, -1e+30
    %v653 = vsel %vm649, %v456, -1e+30
    %v654 = vsel %vm649, %v502, -1e+30
    %v655 = vsel %vm649, %v548, -1e+30
    %v656 = vsel %vm649, %v594, -1e+30
    %v657 = vsel %vm649, %v640, -1e+30
    %vm658 = vcmask 64512
    %v659 = vsel %vm658, %v650, -inf
    %660 = vmax.xlane.f32.xlu0 %v659
    %v661 = vpop.xlane.xlu0 %660
    %v662 = vsel %vm658, %v651, -inf
    %663 = vmax.xlane.f32.xlu0 %v662
    %v664 = vpop.xlane.xlu0 %663
    %v665 = vsel %vm658, %v652, -inf
    %666 = vmax.xlane.f32.xlu0 %v665
    %v667 = vpop.xlane.xlu0 %666
    %v668 = vsel %vm658, %v653, -inf
    %669 = vmax.xlane.f32.xlu0 %v668
    %v670 = vpop.xlane.xlu0 %669
    %v671 = vsel %vm658, %v654, -inf
    %672 = vmax.xlane.f32.xlu0 %v671
    %v673 = vpop.xlane.xlu0 %672
    %v674 = vsel %vm658, %v655, -inf
    %675 = vmax.xlane.f32.xlu0 %v674
    %v676 = vpop.xlane.xlu0 %675
    %v677 = vsel %vm658, %v656, -inf
    %678 = vmax.xlane.f32.xlu0 %v677
    %v679 = vpop.xlane.xlu0 %678
    %v680 = vsel %vm658, %v657, -inf
    %681 = vmax.xlane.f32.xlu0 %v680
    %v682 = vpop.xlane.xlu0 %681
    %v683 = vsub.f32 %v650, %v661
    %v684 = vsub.f32 %v651, %v664
    %v685 = vsub.f32 %v652, %v667
    %v686 = vsub.f32 %v653, %v670
    %v687 = vsub.f32 %v654, %v673
    %v688 = vsub.f32 %v655, %v676
    %v689 = vsub.f32 %v656, %v679
    %v690 = vsub.f32 %v657, %v682
    %v691 = vmul.f32 %v683, 1.442695
    %v692 = vpow.pop %v691
    %v693 = vmul.f32 %v684, 1.442695
    %v694 = vpow.pop %v693
    %v695 = vmul.f32 %v685, 1.442695
    %v696 = vpow.pop %v695
    %v697 = vmul.f32 %v686, 1.442695
    %v698 = vpow.pop %v697
    %v699 = vmul.f32 %v687, 1.442695
    %v700 = vpow.pop %v699
    %v701 = vmul.f32 %v688, 1.442695
    %v702 = vpow.pop %v701
    %v703 = vmul.f32 %v689, 1.442695
    %v704 = vpow.pop %v703
    %v705 = vmul.f32 %v690, 1.442695
    %v706 = vpow.pop %v705
    %v707 = vsel %vm658, %v692, 0.0
    %708 = vadd.xlane.f32.xlu0 %v707
    %v709 = vpop.xlane.xlu0 %708
    %v710 = vsel %vm658, %v694, 0.0
    %711 = vadd.xlane.f32.xlu0 %v710
    %v712 = vpop.xlane.xlu0 %711
    %v713 = vsel %vm658, %v696, 0.0
    %714 = vadd.xlane.f32.xlu0 %v713
    %v715 = vpop.xlane.xlu0 %714
    %v716 = vsel %vm658, %v698, 0.0
    %717 = vadd.xlane.f32.xlu0 %v716
    %v718 = vpop.xlane.xlu0 %717
    %v719 = vsel %vm658, %v700, 0.0
    %720 = vadd.xlane.f32.xlu0 %v719
    %v721 = vpop.xlane.xlu0 %720
    %v722 = vsel %vm658, %v702, 0.0
    %723 = vadd.xlane.f32.xlu0 %v722
    %v724 = vpop.xlane.xlu0 %723
    %v725 = vsel %vm658, %v704, 0.0
    %726 = vadd.xlane.f32.xlu0 %v725
    %v727 = vpop.xlane.xlu0 %726
    %v728 = vsel %vm658, %v706, 0.0
    %729 = vadd.xlane.f32.xlu0 %v728
    %v730 = vpop.xlane.xlu0 %729
    %v731 = vrcp.pop %v709
    %v732 = vmul.f32 %v692, %v731
    %v733 = vrcp.pop %v712
    %v734 = vmul.f32 %v694, %v733
    %v735 = vrcp.pop %v715
    %v736 = vmul.f32 %v696, %v735
    %v737 = vrcp.pop %v718
    %v738 = vmul.f32 %v698, %v737
    %v739 = vrcp.pop %v721
    %v740 = vmul.f32 %v700, %v739
    %v741 = vrcp.pop %v724
    %v742 = vmul.f32 %v702, %v741
    %v743 = vrcp.pop %v727
    %v744 = vmul.f32 %v704, %v743
    %v745 = vrcp.pop %v730
    %v746 = vmul.f32 %v706, %v745
    %v747 = vpack.c.bf16 %v732, %v732
    %v748 = vpack.c.bf16 %v734, %v734
    %v749 = vpack.c.bf16 %v736, %v736
    %v750 = vpack.c.bf16 %v738, %v738
    %v751 = vpack.c.bf16 %v740, %v740
    %v752 = vpack.c.bf16 %v742, %v742
    %v753 = vpack.c.bf16 %v744, %v744
    %v754 = vpack.c.bf16 %v746, %v746
    %v756 = vsel %vm658, %v747, 0
    %vm758 = vcmask 1043456
    %v759 = vsel %vm758, %v167, 0
    %761 = vmatprep.subr.bf16.mxu0 0
    %762 = vmatpush1.bf16.msra.mxu0 %v759
    %763 = vmatprep.subr.bf16.mxu0 0
    %764 = vmatpush1.bf16.msra.mxu0 0
    %765 = vmatprep.subr.bf16.mxu0 0
    %766 = vmatpush1.bf16.msra.mxu0 0
    %767 = vmatprep.subr.bf16.mxu0 0
    %768 = vmatpush1.bf16.msra.mxu0 0
    %769 = vmatprep.subr.bf16.mxu0 0
    %770 = vmatpush1.bf16.msra.mxu0 0
    %771 = vmatprep.subr.bf16.mxu0 0
    %772 = vmatpush1.bf16.msra.mxu0 0
    %773 = vmatprep.subr.bf16.mxu0 0
    %774 = vmatpush1.bf16.msra.mxu0 0
    %775 = vmatprep.subr.bf16.mxu0 0
    %776 = vmatpush1.bf16.msra.mxu0 0
    %777 = vmatprep.subr.bf16.mxu0 0
    %778 = vmatpush1.bf16.msra.mxu0 0
    %779 = vmatprep.subr.bf16.mxu0 0
    %780 = vmatpush1.bf16.msra.mxu0 0
    %781 = vmatprep.subr.bf16.mxu0 0
    %782 = vmatpush1.bf16.msra.mxu0 0
    %783 = vmatprep.subr.bf16.mxu0 0
    %784 = vmatpush1.bf16.msra.mxu0 0
    %785 = vmatprep.subr.bf16.mxu0 0
    %786 = vmatpush1.bf16.msra.mxu0 0
    %787 = vmatprep.subr.bf16.mxu0 0
    %788 = vmatpush1.bf16.msra.mxu0 0
    %789 = vmatprep.subr.bf16.mxu0 0
    %790 = vmatpush1.bf16.msra.mxu0 0
    %791 = vmatprep.subr.bf16.mxu0 0
    %792 = vmatpush1.bf16.msra.mxu0 0
    %793 = vmatprep.mubr.bf16.mxu0 0
    %794 = vmatmul.mubr.bf16.gmra.mrb[0].mxu0 %v756
    %v795 = vpop.f32.mrb[0].mxu0
    %v796 = vadd.f32 0.0, %v795
    %v797 = vpop.f32.mrb[0].mxu0
    %v798 = vpop.f32.mrb[0].mxu0
    %v799 = vpop.f32.mrb[0].mxu0
    %800 = vdwg.mxu0
    %v802 = vsel %vm658, %v748, 0
    %v804 = vsel %vm758, %v168, 0
    %806 = vmatprep.subr.bf16.mxu0 0
    %807 = vmatpush1.bf16.msra.mxu0 %v804
    %808 = vmatprep.subr.bf16.mxu0 0
    %809 = vmatpush1.bf16.msra.mxu0 0
    %810 = vmatprep.subr.bf16.mxu0 0
    %811 = vmatpush1.bf16.msra.mxu0 0
    %812 = vmatprep.subr.bf16.mxu0 0
    %813 = vmatpush1.bf16.msra.mxu0 0
    %814 = vmatprep.subr.bf16.mxu0 0
    %815 = vmatpush1.bf16.msra.mxu0 0
    %816 = vmatprep.subr.bf16.mxu0 0
    %817 = vmatpush1.bf16.msra.mxu0 0
    %818 = vmatprep.subr.bf16.mxu0 0
    %819 = vmatpush1.bf16.msra.mxu0 0
    %820 = vmatprep.subr.bf16.mxu0 0
    %821 = vmatpush1.bf16.msra.mxu0 0
    %822 = vmatprep.subr.bf16.mxu0 0
    %823 = vmatpush1.bf16.msra.mxu0 0
    %824 = vmatprep.subr.bf16.mxu0 0
    %825 = vmatpush1.bf16.msra.mxu0 0
    %826 = vmatprep.subr.bf16.mxu0 0
    %827 = vmatpush1.bf16.msra.mxu0 0
    %828 = vmatprep.subr.bf16.mxu0 0
    %829 = vmatpush1.bf16.msra.mxu0 0
    %830 = vmatprep.subr.bf16.mxu0 0
    %831 = vmatpush1.bf16.msra.mxu0 0
    %832 = vmatprep.subr.bf16.mxu0 0
    %833 = vmatpush1.bf16.msra.mxu0 0
    %834 = vmatprep.subr.bf16.mxu0 0
    %835 = vmatpush1.bf16.msra.mxu0 0
    %836 = vmatprep.subr.bf16.mxu0 0
    %837 = vmatpush1.bf16.msra.mxu0 0
    %838 = vmatprep.mubr.bf16.mxu0 0
    %839 = vmatmul.mubr.bf16.gmra.mrb[0].mxu0 %v802
    %v840 = vpop.f32.mrb[0].mxu0
    %v841 = vadd.f32 0.0, %v840
    %v842 = vpop.f32.mrb[0].mxu0
    %v843 = vpop.f32.mrb[0].mxu0
    %v844 = vpop.f32.mrb[0].mxu0
    %845 = vdwg.mxu0
    %v847 = vsel %vm658, %v749, 0
    %v849 = vsel %vm758, %v169, 0
    %851 = vmatprep.subr.bf16.mxu0 0
    %852 = vmatpush1.bf16.msra.mxu0 %v849
    %853 = vmatprep.subr.bf16.mxu0 0
    %854 = vmatpush1.bf16.msra.mxu0 0
    %855 = vmatprep.subr.bf16.mxu0 0
    %856 = vmatpush1.bf16.msra.mxu0 0
    %857 = vmatprep.subr.bf16.mxu0 0
    %858 = vmatpush1.bf16.msra.mxu0 0
    %859 = vmatprep.subr.bf16.mxu0 0
    %860 = vmatpush1.bf16.msra.mxu0 0
    %861 = vmatprep.subr.bf16.mxu0 0
    %862 = vmatpush1.bf16.msra.mxu0 0
    %863 = vmatprep.subr.bf16.mxu0 0
    %864 = vmatpush1.bf16.msra.mxu0 0
    %865 = vmatprep.subr.bf16.mxu0 0
    %866 = vmatpush1.bf16.msra.mxu0 0
    %867 = vmatprep.subr.bf16.mxu0 0
    %868 = vmatpush1.bf16.msra.mxu0 0
    %869 = vmatprep.subr.bf16.mxu0 0
    %870 = vmatpush1.bf16.msra.mxu0 0
    %871 = vmatprep.subr.bf16.mxu0 0
    %872 = vmatpush1.bf16.msra.mxu0 0
    %873 = vmatprep.subr.bf16.mxu0 0
    %874 = vmatpush1.bf16.msra.mxu0 0
    %875 = vmatprep.subr.bf16.mxu0 0
    %876 = vmatpush1.bf16.msra.mxu0 0
    %877 = vmatprep.subr.bf16.mxu0 0
    %878 = vmatpush1.bf16.msra.mxu0 0
    %879 = vmatprep.subr.bf16.mxu0 0
    %880 = vmatpush1.bf16.msra.mxu0 0
    %881 = vmatprep.subr.bf16.mxu0 0
    %882 = vmatpush1.bf16.msra.mxu0 0
    %883 = vmatprep.mubr.bf16.mxu0 0
    %884 = vmatmul.mubr.bf16.gmra.mrb[0].mxu0 %v847
    %v885 = vpop.f32.mrb[0].mxu0
    %v886 = vadd.f32 0.0, %v885
    %v887 = vpop.f32.mrb[0].mxu0
    %v888 = vpop.f32.mrb[0].mxu0
    %v889 = vpop.f32.mrb[0].mxu0
    %890 = vdwg.mxu0
    %v892 = vsel %vm658, %v750, 0
    %v894 = vsel %vm758, %v170, 0
    %896 = vmatprep.subr.bf16.mxu0 0
    %897 = vmatpush1.bf16.msra.mxu0 %v894
    %898 = vmatprep.subr.bf16.mxu0 0
    %899 = vmatpush1.bf16.msra.mxu0 0
    %900 = vmatprep.subr.bf16.mxu0 0
    %901 = vmatpush1.bf16.msra.mxu0 0
    %902 = vmatprep.subr.bf16.mxu0 0
    %903 = vmatpush1.bf16.msra.mxu0 0
    %904 = vmatprep.subr.bf16.mxu0 0
    %905 = vmatpush1.bf16.msra.mxu0 0
    %906 = vmatprep.subr.bf16.mxu0 0
    %907 = vmatpush1.bf16.msra.mxu0 0
    %908 = vmatprep.subr.bf16.mxu0 0
    %909 = vmatpush1.bf16.msra.mxu0 0
    %910 = vmatprep.subr.bf16.mxu0 0
    %911 = vmatpush1.bf16.msra.mxu0 0
    %912 = vmatprep.subr.bf16.mxu0 0
    %913 = vmatpush1.bf16.msra.mxu0 0
    %914 = vmatprep.subr.bf16.mxu0 0
    %915 = vmatpush1.bf16.msra.mxu0 0
    %916 = vmatprep.subr.bf16.mxu0 0
    %917 = vmatpush1.bf16.msra.mxu0 0
    %918 = vmatprep.subr.bf16.mxu0 0
    %919 = vmatpush1.bf16.msra.mxu0 0
    %920 = vmatprep.subr.bf16.mxu0 0
    %921 = vmatpush1.bf16.msra.mxu0 0
    %922 = vmatprep.subr.bf16.mxu0 0
    %923 = vmatpush1.bf16.msra.mxu0 0
    %924 = vmatprep.subr.bf16.mxu0 0
    %925 = vmatpush1.bf16.msra.mxu0 0
    %926 = vmatprep.subr.bf16.mxu0 0
    %927 = vmatpush1.bf16.msra.mxu0 0
    %928 = vmatprep.mubr.bf16.mxu0 0
    %929 = vmatmul.mubr.bf16.gmra.mrb[0].mxu0 %v892
    %v930 = vpop.f32.mrb[0].mxu0
    %v931 = vadd.f32 0.0, %v930
    %v932 = vpop.f32.mrb[0].mxu0
    %v933 = vpop.f32.mrb[0].mxu0
    %v934 = vpop.f32.mrb[0].mxu0
    %935 = vdwg.mxu0
    %v937 = vsel %vm658, %v751, 0
    %v939 = vsel %vm758, %v171, 0
    %941 = vmatprep.subr.bf16.mxu0 0
    %942 = vmatpush1.bf16.msra.mxu0 %v939
    %943 = vmatprep.subr.bf16.mxu0 0
    %944 = vmatpush1.bf16.msra.mxu0 0
    %945 = vmatprep.subr.bf16.mxu0 0
    %946 = vmatpush1.bf16.msra.mxu0 0
    %947 = vmatprep.subr.bf16.mxu0 0
    %948 = vmatpush1.bf16.msra.mxu0 0
    %949 = vmatprep.subr.bf16.mxu0 0
    %950 = vmatpush1.bf16.msra.mxu0 0
    %951 = vmatprep.subr.bf16.mxu0 0
    %952 = vmatpush1.bf16.msra.mxu0 0
    %953 = vmatprep.subr.bf16.mxu0 0
    %954 = vmatpush1.bf16.msra.mxu0 0
    %955 = vmatprep.subr.bf16.mxu0 0
    %956 = vmatpush1.bf16.msra.mxu0 0
    %957 = vmatprep.subr.bf16.mxu0 0
    %958 = vmatpush1.bf16.msra.mxu0 0
    %959 = vmatprep.subr.bf16.mxu0 0
    %960 = vmatpush1.bf16.msra.mxu0 0
    %961 = vmatprep.subr.bf16.mxu0 0
    %962 = vmatpush1.bf16.msra.mxu0 0
    %963 = vmatprep.subr.bf16.mxu0 0
    %964 = vmatpush1.bf16.msra.mxu0 0
    %965 = vmatprep.subr.bf16.mxu0 0
    %966 = vmatpush1.bf16.msra.mxu0 0
    %967 = vmatprep.subr.bf16.mxu0 0
    %968 = vmatpush1.bf16.msra.mxu0 0
    %969 = vmatprep.subr.bf16.mxu0 0
    %970 = vmatpush1.bf16.msra.mxu0 0
    %971 = vmatprep.subr.bf16.mxu0 0
    %972 = vmatpush1.bf16.msra.mxu0 0
    %973 = vmatprep.mubr.bf16.mxu0 0
    %974 = vmatmul.mubr.bf16.gmra.mrb[0].mxu0 %v937
    %v975 = vpop.f32.mrb[0].mxu0
    %v976 = vadd.f32 0.0, %v975
    %v977 = vpop.f32.mrb[0].mxu0
    %v978 = vpop.f32.mrb[0].mxu0
    %v979 = vpop.f32.mrb[0].mxu0
    %980 = vdwg.mxu0
    %v982 = vsel %vm658, %v752, 0
    %v984 = vsel %vm758, %v172, 0
    %986 = vmatprep.subr.bf16.mxu0 0
    %987 = vmatpush1.bf16.msra.mxu0 %v984
    %988 = vmatprep.subr.bf16.mxu0 0
    %989 = vmatpush1.bf16.msra.mxu0 0
    %990 = vmatprep.subr.bf16.mxu0 0
    %991 = vmatpush1.bf16.msra.mxu0 0
    %992 = vmatprep.subr.bf16.mxu0 0
    %993 = vmatpush1.bf16.msra.mxu0 0
    %994 = vmatprep.subr.bf16.mxu0 0
    %995 = vmatpush1.bf16.msra.mxu0 0
    %996 = vmatprep.subr.bf16.mxu0 0
    %997 = vmatpush1.bf16.msra.mxu0 0
    %998 = vmatprep.subr.bf16.mxu0 0
    %999 = vmatpush1.bf16.msra.mxu0 0
    %1000 = vmatprep.subr.bf16.mxu0 0
    %1001 = vmatpush1.bf16.msra.mxu0 0
    %1002 = vmatprep.subr.bf16.mxu0 0
    %1003 = vmatpush1.bf16.msra.mxu0 0
    %1004 = vmatprep.subr.bf16.mxu0 0
    %1005 = vmatpush1.bf16.msra.mxu0 0
    %1006 = vmatprep.subr.bf16.mxu0 0
    %1007 = vmatpush1.bf16.msra.mxu0 0
    %1008 = vmatprep.subr.bf16.mxu0 0
    %1009 = vmatpush1.bf16.msra.mxu0 0
    %1010 = vmatprep.subr.bf16.mxu0 0
    %1011 = vmatpush1.bf16.msra.mxu0 0
    %1012 = vmatprep.subr.bf16.mxu0 0
    %1013 = vmatpush1.bf16.msra.mxu0 0
    %1014 = vmatprep.subr.bf16.mxu0 0
    %1015 = vmatpush1.bf16.msra.mxu0 0
    %1016 = vmatprep.subr.bf16.mxu0 0
    %1017 = vmatpush1.bf16.msra.mxu0 0
    %1018 = vmatprep.mubr.bf16.mxu0 0
    %1019 = vmatmul.mubr.bf16.gmra.mrb[0].mxu0 %v982
    %v1020 = vpop.f32.mrb[0].mxu0
    %v1021 = vadd.f32 0.0, %v1020
    %v1022 = vpop.f32.mrb[0].mxu0
    %v1023 = vpop.f32.mrb[0].mxu0
    %v1024 = vpop.f32.mrb[0].mxu0
    %1025 = vdwg.mxu0
    %v1027 = vsel %vm658, %v753, 0
    %v1029 = vsel %vm758, %v173, 0
    %1031 = vmatprep.subr.bf16.mxu0 0
    %1032 = vmatpush1.bf16.msra.mxu0 %v1029
    %1033 = vmatprep.subr.bf16.mxu0 0
    %1034 = vmatpush1.bf16.msra.mxu0 0
    %1035 = vmatprep.subr.bf16.mxu0 0
    %1036 = vmatpush1.bf16.msra.mxu0 0
    %1037 = vmatprep.subr.bf16.mxu0 0
    %1038 = vmatpush1.bf16.msra.mxu0 0
    %1039 = vmatprep.subr.bf16.mxu0 0
    %1040 = vmatpush1.bf16.msra.mxu0 0
    %1041 = vmatprep.subr.bf16.mxu0 0
    %1042 = vmatpush1.bf16.msra.mxu0 0
    %1043 = vmatprep.subr.bf16.mxu0 0
    %1044 = vmatpush1.bf16.msra.mxu0 0
    %1045 = vmatprep.subr.bf16.mxu0 0
    %1046 = vmatpush1.bf16.msra.mxu0 0
    %1047 = vmatprep.subr.bf16.mxu0 0
    %1048 = vmatpush1.bf16.msra.mxu0 0
    %1049 = vmatprep.subr.bf16.mxu0 0
    %1050 = vmatpush1.bf16.msra.mxu0 0
    %1051 = vmatprep.subr.bf16.mxu0 0
    %1052 = vmatpush1.bf16.msra.mxu0 0
    %1053 = vmatprep.subr.bf16.mxu0 0
    %1054 = vmatpush1.bf16.msra.mxu0 0
    %1055 = vmatprep.subr.bf16.mxu0 0
    %1056 = vmatpush1.bf16.msra.mxu0 0
    %1057 = vmatprep.subr.bf16.mxu0 0
    %1058 = vmatpush1.bf16.msra.mxu0 0
    %1059 = vmatprep.subr.bf16.mxu0 0
    %1060 = vmatpush1.bf16.msra.mxu0 0
    %1061 = vmatprep.subr.bf16.mxu0 0
    %1062 = vmatpush1.bf16.msra.mxu0 0
    %1063 = vmatprep.mubr.bf16.mxu0 0
    %1064 = vmatmul.mubr.bf16.gmra.mrb[0].mxu0 %v1027
    %v1065 = vpop.f32.mrb[0].mxu0
    %v1066 = vadd.f32 0.0, %v1065
    %v1067 = vpop.f32.mrb[0].mxu0
    %v1068 = vpop.f32.mrb[0].mxu0
    %v1069 = vpop.f32.mrb[0].mxu0
    %1070 = vdwg.mxu0
    %v1072 = vsel %vm658, %v754, 0
    %v1074 = vsel %vm758, %v174, 0
    %1076 = vmatprep.subr.bf16.mxu0 0
    %1077 = vmatpush1.bf16.msra.mxu0 %v1074
    %1078 = vmatprep.subr.bf16.mxu0 0
    %1079 = vmatpush1.bf16.msra.mxu0 0
    %1080 = vmatprep.subr.bf16.mxu0 0
    %1081 = vmatpush1.bf16.msra.mxu0 0
    %1082 = vmatprep.subr.bf16.mxu0 0
    %1083 = vmatpush1.bf16.msra.mxu0 0
    %1084 = vmatprep.subr.bf16.mxu0 0
    %1085 = vmatpush1.bf16.msra.mxu0 0
    %1086 = vmatprep.subr.bf16.mxu0 0
    %1087 = vmatpush1.bf16.msra.mxu0 0
    %1088 = vmatprep.subr.bf16.mxu0 0
    %1089 = vmatpush1.bf16.msra.mxu0 0
    %1090 = vmatprep.subr.bf16.mxu0 0
    %1091 = vmatpush1.bf16.msra.mxu0 0
    %1092 = vmatprep.subr.bf16.mxu0 0
    %1093 = vmatpush1.bf16.msra.mxu0 0
    %1094 = vmatprep.subr.bf16.mxu0 0
    %1095 = vmatpush1.bf16.msra.mxu0 0
    %1096 = vmatprep.subr.bf16.mxu0 0
    %1097 = vmatpush1.bf16.msra.mxu0 0
    %1098 = vmatprep.subr.bf16.mxu0 0
    %1099 = vmatpush1.bf16.msra.mxu0 0
    %1100 = vmatprep.subr.bf16.mxu0 0
    %1101 = vmatpush1.bf16.msra.mxu0 0
    %1102 = vmatprep.subr.bf16.mxu0 0
    %1103 = vmatpush1.bf16.msra.mxu0 0
    %1104 = vmatprep.subr.bf16.mxu0 0
    %1105 = vmatpush1.bf16.msra.mxu0 0
    %1106 = vmatprep.subr.bf16.mxu0 0
    %1107 = vmatpush1.bf16.msra.mxu0 0
    %1108 = vmatprep.mubr.bf16.mxu0 0
    %1109 = vmatmul.mubr.bf16.gmra.mrb[0].mxu0 %v1072
    %v1110 = vpop.f32.mrb[0].mxu0
    %v1111 = vadd.f32 0.0, %v1110
    %v1112 = vpop.f32.mrb[0].mxu0
    %v1113 = vpop.f32.mrb[0].mxu0
    %v1114 = vpop.f32.mrb[0].mxu0
    %1115 = vdwg.mxu0
    %v1116 = vpack.c.bf16 %v841, %v796
    %v1117 = vpack.c.bf16 %v931, %v886
    %v1118 = vpack.c.bf16 %v1021, %v976
    %v1119 = vpack.c.bf16 %v1111, %v1066
    %v1124 = vunpack.c.l.b16 %v47
    %v1125 = vunpack.c.l.b16 %v48
    %v1126 = vunpack.c.l.b16 %v49
    %v1127 = vunpack.c.l.b16 %v50
    %v1128 = vpack.c.b16 %v1125, %v1124
    %v1129 = vpack.c.b16 %v1127, %v1126
    %v1133 = vsel %vm191, %v1116, 0
    %v1136 = vsel %vm191, %v1117, 0
    %v1139 = vsel %vm191, %v1118, 0
    %v1142 = vsel %vm191, %v1119, 0
    %1144 = vmatprep.subr.bf16.mxu0 0
    %1145 = vmatpush1.bf16.msra.mxu0 %v1128
    %1146 = vmatprep.subr.bf16.mxu0 0
    %1147 = vmatpush1.bf16.msra.mxu0 %v1129
    %1148 = vmatprep.subr.bf16.mxu0 0
    %1149 = vmatpush1.bf16.msra.mxu0 0
    %1150 = vmatprep.subr.bf16.mxu0 0
    %1151 = vmatpush1.bf16.msra.mxu0 0
    %1152 = vmatprep.subr.bf16.mxu0 0
    %1153 = vmatpush1.bf16.msra.mxu0 0
    %1154 = vmatprep.subr.bf16.mxu0 0
    %1155 = vmatpush1.bf16.msra.mxu0 0
    %1156 = vmatprep.subr.bf16.mxu0 0
    %1157 = vmatpush1.bf16.msra.mxu0 0
    %1158 = vmatprep.subr.bf16.mxu0 0
    %1159 = vmatpush1.bf16.msra.mxu0 0
    %1160 = vmatprep.subr.bf16.mxu0 0
    %1161 = vmatpush1.bf16.msra.mxu0 0
    %1162 = vmatprep.subr.bf16.mxu0 0
    %1163 = vmatpush1.bf16.msra.mxu0 0
    %1164 = vmatprep.subr.bf16.mxu0 0
    %1165 = vmatpush1.bf16.msra.mxu0 0
    %1166 = vmatprep.subr.bf16.mxu0 0
    %1167 = vmatpush1.bf16.msra.mxu0 0
    %1168 = vmatprep.subr.bf16.mxu0 0
    %1169 = vmatpush1.bf16.msra.mxu0 0
    %1170 = vmatprep.subr.bf16.mxu0 0
    %1171 = vmatpush1.bf16.msra.mxu0 0
    %1172 = vmatprep.subr.bf16.mxu0 0
    %1173 = vmatpush1.bf16.msra.mxu0 0
    %1174 = vmatprep.subr.bf16.mxu0 0
    %1175 = vmatpush1.bf16.msra.mxu0 0
    %1176 = vmatprep.mubr.bf16.mxu0 0
    %1177 = vmatmul.mubr.bf16.gmra.mrb[0].mxu0 %v1133
    %v1178 = vpop.f32.mrb[0].mxu0
    %v1179 = vadd.f32 0.0, %v1178
    %v1180 = vpop.f32.mrb[0].mxu0
    %v1181 = vpop.f32.mrb[0].mxu0
    %v1182 = vadd.f32 0.0, %v1181
    %v1183 = vpop.f32.mrb[0].mxu0
    %1184 = vmatprep.mubr.bf16.mxu0 0
    %1185 = vmatmul.mubr.bf16.gmra.mrb[0].mxu0 %v1136
    %v1186 = vpop.f32.mrb[0].mxu0
    %v1187 = vadd.f32 0.0, %v1186
    %v1188 = vpop.f32.mrb[0].mxu0
    %v1189 = vpop.f32.mrb[0].mxu0
    %v1190 = vadd.f32 0.0, %v1189
    %v1191 = vpop.f32.mrb[0].mxu0
    %1192 = vmatprep.mubr.bf16.mxu0 0
    %1193 = vmatmul.mubr.bf16.gmra.mrb[0].mxu0 %v1139
    %v1194 = vpop.f32.mrb[0].mxu0
    %v1195 = vadd.f32 0.0, %v1194
    %v1196 = vpop.f32.mrb[0].mxu0
    %v1197 = vpop.f32.mrb[0].mxu0
    %v1198 = vadd.f32 0.0, %v1197
    %v1199 = vpop.f32.mrb[0].mxu0
    %1200 = vmatprep.mubr.bf16.mxu0 0
    %1201 = vmatmul.mubr.bf16.gmra.mrb[0].mxu0 %v1142
    %v1202 = vpop.f32.mrb[0].mxu0
    %v1203 = vadd.f32 0.0, %v1202
    %v1204 = vpop.f32.mrb[0].mxu0
    %v1205 = vpop.f32.mrb[0].mxu0
    %v1206 = vadd.f32 0.0, %v1205
    %v1207 = vpop.f32.mrb[0].mxu0
    %1208 = vdwg.mxu0
    %v1209 = vmax.f32 %v1179, 0.0
    %v1210 = vmax.f32 %v1182, 0.0
    %v1211 = vmax.f32 %v1187, 0.0
    %v1212 = vmax.f32 %v1190, 0.0
    %v1213 = vmax.f32 %v1195, 0.0
    %v1214 = vmax.f32 %v1198, 0.0
    %v1215 = vmax.f32 %v1203, 0.0
    %v1216 = vmax.f32 %v1206, 0.0
    %v1217 = vpack.c.bf16 %v1209, %v1209
    %v1218 = vpack.c.bf16 %v1210, %v1210
    %v1219 = vpack.c.bf16 %v1211, %v1211
    %v1220 = vpack.c.bf16 %v1212, %v1212
    %v1221 = vpack.c.bf16 %v1213, %v1213
    %v1222 = vpack.c.bf16 %v1214, %v1214
    %v1223 = vpack.c.bf16 %v1215, %v1215
    %v1224 = vpack.c.bf16 %v1216, %v1216
    %v1226 = vsel %vm758, %v1217, 0
    %1228 = vmatprep.subr.bf16.mxu0 0
    %1229 = vmatpush1.bf16.msra.mxu0 %v1226
    %1230 = vmatprep.subr.bf16.mxu0 0
    %1231 = vmatpush1.bf16.msra.mxu0 0
    %1232 = vmatprep.subr.bf16.mxu0 0
    %1233 = vmatpush1.bf16.msra.mxu0 0
    %1234 = vmatprep.subr.bf16.mxu0 0
    %1235 = vmatpush1.bf16.msra.mxu0 0
    %1236 = vmatprep.subr.bf16.mxu0 0
    %1237 = vmatpush1.bf16.msra.mxu0 0
    %1238 = vmatprep.subr.bf16.mxu0 0
    %1239 = vmatpush1.bf16.msra.mxu0 0
    %1240 = vmatprep.subr.bf16.mxu0 0
    %1241 = vmatpush1.bf16.msra.mxu0 0
    %1242 = vmatprep.subr.bf16.mxu0 0
    %1243 = vmatpush1.bf16.msra.mxu0 0
    %1244 = vmatprep.subr.bf16.mxu0 0
    %1245 = vmatpush1.bf16.msra.mxu0 0
    %1246 = vmatprep.subr.bf16.mxu0 0
    %1247 = vmatpush1.bf16.msra.mxu0 0
    %1248 = vmatprep.subr.bf16.mxu0 0
    %1249 = vmatpush1.bf16.msra.mxu0 0
    %1250 = vmatprep.subr.bf16.mxu0 0
    %1251 = vmatpush1.bf16.msra.mxu0 0
    %1252 = vmatprep.subr.bf16.mxu0 0
    %1253 = vmatpush1.bf16.msra.mxu0 0
    %1254 = vmatprep.subr.bf16.mxu0 0
    %1255 = vmatpush1.bf16.msra.mxu0 0
    %1256 = vmatprep.subr.bf16.mxu0 0
    %1257 = vmatpush1.bf16.msra.mxu0 0
    %1258 = vmatprep.subr.bf16.mxu0 0
    %1259 = vmatpush1.bf16.msra.mxu0 0
    %1260 = vmatprep.mubr.bf16.mxu0 0
    %1261 = vmatmul.mubr.bf16.gmra.mrb[0].mxu0 %v756
    %v1262 = vpop.f32.mrb[0].mxu0
    %v1263 = vadd.f32 0.0, %v1262
    %v1264 = vpop.f32.mrb[0].mxu0
    %v1265 = vpop.f32.mrb[0].mxu0
    %v1266 = vpop.f32.mrb[0].mxu0
    %1267 = vdwg.mxu0
    %v1269 = vsel %vm758, %v1218, 0
    %1271 = vmatprep.subr.bf16.mxu0 0
    %1272 = vmatpush1.bf16.msra.mxu0 %v1269
    %1273 = vmatprep.subr.bf16.mxu0 0
    %1274 = vmatpush1.bf16.msra.mxu0 0
    %1275 = vmatprep.subr.bf16.mxu0 0
    %1276 = vmatpush1.bf16.msra.mxu0 0
    %1277 = vmatprep.subr.bf16.mxu0 0
    %1278 = vmatpush1.bf16.msra.mxu0 0
    %1279 = vmatprep.subr.bf16.mxu0 0
    %1280 = vmatpush1.bf16.msra.mxu0 0
    %1281 = vmatprep.subr.bf16.mxu0 0
    %1282 = vmatpush1.bf16.msra.mxu0 0
    %1283 = vmatprep.subr.bf16.mxu0 0
    %1284 = vmatpush1.bf16.msra.mxu0 0
    %1285 = vmatprep.subr.bf16.mxu0 0
    %1286 = vmatpush1.bf16.msra.mxu0 0
    %1287 = vmatprep.subr.bf16.mxu0 0
    %1288 = vmatpush1.bf16.msra.mxu0 0
    %1289 = vmatprep.subr.bf16.mxu0 0
    %1290 = vmatpush1.bf16.msra.mxu0 0
    %1291 = vmatprep.subr.bf16.mxu0 0
    %1292 = vmatpush1.bf16.msra.mxu0 0
    %1293 = vmatprep.subr.bf16.mxu0 0
    %1294 = vmatpush1.bf16.msra.mxu0 0
    %1295 = vmatprep.subr.bf16.mxu0 0
    %1296 = vmatpush1.bf16.msra.mxu0 0
    %1297 = vmatprep.subr.bf16.mxu0 0
    %1298 = vmatpush1.bf16.msra.mxu0 0
    %1299 = vmatprep.subr.bf16.mxu0 0
    %1300 = vmatpush1.bf16.msra.mxu0 0
    %1301 = vmatprep.subr.bf16.mxu0 0
    %1302 = vmatpush1.bf16.msra.mxu0 0
    %1303 = vmatprep.mubr.bf16.mxu0 0
    %1304 = vmatmul.mubr.bf16.gmra.mrb[0].mxu0 %v802
    %v1305 = vpop.f32.mrb[0].mxu0
    %v1306 = vadd.f32 0.0, %v1305
    %v1307 = vpop.f32.mrb[0].mxu0
    %v1308 = vpop.f32.mrb[0].mxu0
    %v1309 = vpop.f32.mrb[0].mxu0
    %1310 = vdwg.mxu0
    %v1312 = vsel %vm758, %v1219, 0
    %1314 = vmatprep.subr.bf16.mxu0 0
    %1315 = vmatpush1.bf16.msra.mxu0 %v1312
    %1316 = vmatprep.subr.bf16.mxu0 0
    %1317 = vmatpush1.bf16.msra.mxu0 0
    %1318 = vmatprep.subr.bf16.mxu0 0
    %1319 = vmatpush1.bf16.msra.mxu0 0
    %1320 = vmatprep.subr.bf16.mxu0 0
    %1321 = vmatpush1.bf16.msra.mxu0 0
    %1322 = vmatprep.subr.bf16.mxu0 0
    %1323 = vmatpush1.bf16.msra.mxu0 0
    %1324 = vmatprep.subr.bf16.mxu0 0
    %1325 = vmatpush1.bf16.msra.mxu0 0
    %1326 = vmatprep.subr.bf16.mxu0 0
    %1327 = vmatpush1.bf16.msra.mxu0 0
    %1328 = vmatprep.subr.bf16.mxu0 0
    %1329 = vmatpush1.bf16.msra.mxu0 0
    %1330 = vmatprep.subr.bf16.mxu0 0
    %1331 = vmatpush1.bf16.msra.mxu0 0
    %1332 = vmatprep.subr.bf16.mxu0 0
    %1333 = vmatpush1.bf16.msra.mxu0 0
    %1334 = vmatprep.subr.bf16.mxu0 0
    %1335 = vmatpush1.bf16.msra.mxu0 0
    %1336 = vmatprep.subr.bf16.mxu0 0
    %1337 = vmatpush1.bf16.msra.mxu0 0
    %1338 = vmatprep.subr.bf16.mxu0 0
    %1339 = vmatpush1.bf16.msra.mxu0 0
    %1340 = vmatprep.subr.bf16.mxu0 0
    %1341 = vmatpush1.bf16.msra.mxu0 0
    %1342 = vmatprep.subr.bf16.mxu0 0
    %1343 = vmatpush1.bf16.msra.mxu0 0
    %1344 = vmatprep.subr.bf16.mxu0 0
    %1345 = vmatpush1.bf16.msra.mxu0 0
    %1346 = vmatprep.mubr.bf16.mxu0 0
    %1347 = vmatmul.mubr.bf16.gmra.mrb[0].mxu0 %v847
    %v1348 = vpop.f32.mrb[0].mxu0
    %v1349 = vadd.f32 0.0, %v1348
    %v1350 = vpop.f32.mrb[0].mxu0
    %v1351 = vpop.f32.mrb[0].mxu0
    %v1352 = vpop.f32.mrb[0].mxu0
    %1353 = vdwg.mxu0
    %v1355 = vsel %vm758, %v1220, 0
    %1357 = vmatprep.subr.bf16.mxu0 0
    %1358 = vmatpush1.bf16.msra.mxu0 %v1355
    %1359 = vmatprep.subr.bf16.mxu0 0
    %1360 = vmatpush1.bf16.msra.mxu0 0
    %1361 = vmatprep.subr.bf16.mxu0 0
    %1362 = vmatpush1.bf16.msra.mxu0 0
    %1363 = vmatprep.subr.bf16.mxu0 0
    %1364 = vmatpush1.bf16.msra.mxu0 0
    %1365 = vmatprep.subr.bf16.mxu0 0
    %1366 = vmatpush1.bf16.msra.mxu0 0
    %1367 = vmatprep.subr.bf16.mxu0 0
    %1368 = vmatpush1.bf16.msra.mxu0 0
    %1369 = vmatprep.subr.bf16.mxu0 0
    %1370 = vmatpush1.bf16.msra.mxu0 0
    %1371 = vmatprep.subr.bf16.mxu0 0
    %1372 = vmatpush1.bf16.msra.mxu0 0
    %1373 = vmatprep.subr.bf16.mxu0 0
    %1374 = vmatpush1.bf16.msra.mxu0 0
    %1375 = vmatprep.subr.bf16.mxu0 0
    %1376 = vmatpush1.bf16.msra.mxu0 0
    %1377 = vmatprep.subr.bf16.mxu0 0
    %1378 = vmatpush1.bf16.msra.mxu0 0
    %1379 = vmatprep.subr.bf16.mxu0 0
    %1380 = vmatpush1.bf16.msra.mxu0 0
    %1381 = vmatprep.subr.bf16.mxu0 0
    %1382 = vmatpush1.bf16.msra.mxu0 0
    %1383 = vmatprep.subr.bf16.mxu0 0
    %1384 = vmatpush1.bf16.msra.mxu0 0
    %1385 = vmatprep.subr.bf16.mxu0 0
    %1386 = vmatpush1.bf16.msra.mxu0 0
    %1387 = vmatprep.subr.bf16.mxu0 0
    %1388 = vmatpush1.bf16.msra.mxu0 0
    %1389 = vmatprep.mubr.bf16.mxu0 0
    %1390 = vmatmul.mubr.bf16.gmra.mrb[0].mxu0 %v892
    %v1391 = vpop.f32.mrb[0].mxu0
    %v1392 = vadd.f32 0.0, %v1391
    %v1393 = vpop.f32.mrb[0].mxu0
    %v1394 = vpop.f32.mrb[0].mxu0
    %v1395 = vpop.f32.mrb[0].mxu0
    %1396 = vdwg.mxu0
    %v1398 = vsel %vm758, %v1221, 0
    %1400 = vmatprep.subr.bf16.mxu0 0
    %1401 = vmatpush1.bf16.msra.mxu0 %v1398
    %1402 = vmatprep.subr.bf16.mxu0 0
    %1403 = vmatpush1.bf16.msra.mxu0 0
    %1404 = vmatprep.subr.bf16.mxu0 0
    %1405 = vmatpush1.bf16.msra.mxu0 0
    %1406 = vmatprep.subr.bf16.mxu0 0
    %1407 = vmatpush1.bf16.msra.mxu0 0
    %1408 = vmatprep.subr.bf16.mxu0 0
    %1409 = vmatpush1.bf16.msra.mxu0 0
    %1410 = vmatprep.subr.bf16.mxu0 0
    %1411 = vmatpush1.bf16.msra.mxu0 0
    %1412 = vmatprep.subr.bf16.mxu0 0
    %1413 = vmatpush1.bf16.msra.mxu0 0
    %1414 = vmatprep.subr.bf16.mxu0 0
    %1415 = vmatpush1.bf16.msra.mxu0 0
    %1416 = vmatprep.subr.bf16.mxu0 0
    %1417 = vmatpush1.bf16.msra.mxu0 0
    %1418 = vmatprep.subr.bf16.mxu0 0
    %1419 = vmatpush1.bf16.msra.mxu0 0
    %1420 = vmatprep.subr.bf16.mxu0 0
    %1421 = vmatpush1.bf16.msra.mxu0 0
    %1422 = vmatprep.subr.bf16.mxu0 0
    %1423 = vmatpush1.bf16.msra.mxu0 0
    %1424 = vmatprep.subr.bf16.mxu0 0
    %1425 = vmatpush1.bf16.msra.mxu0 0
    %1426 = vmatprep.subr.bf16.mxu0 0
    %1427 = vmatpush1.bf16.msra.mxu0 0
    %1428 = vmatprep.subr.bf16.mxu0 0
    %1429 = vmatpush1.bf16.msra.mxu0 0
    %1430 = vmatprep.subr.bf16.mxu0 0
    %1431 = vmatpush1.bf16.msra.mxu0 0
    %1432 = vmatprep.mubr.bf16.mxu0 0
    %1433 = vmatmul.mubr.bf16.gmra.mrb[0].mxu0 %v937
    %v1434 = vpop.f32.mrb[0].mxu0
    %v1435 = vadd.f32 0.0, %v1434
    %v1436 = vpop.f32.mrb[0].mxu0
    %v1437 = vpop.f32.mrb[0].mxu0
    %v1438 = vpop.f32.mrb[0].mxu0
    %1439 = vdwg.mxu0
    %v1441 = vsel %vm758, %v1222, 0
    %1443 = vmatprep.subr.bf16.mxu0 0
    %1444 = vmatpush1.bf16.msra.mxu0 %v1441
    %1445 = vmatprep.subr.bf16.mxu0 0
    %1446 = vmatpush1.bf16.msra.mxu0 0
    %1447 = vmatprep.subr.bf16.mxu0 0
    %1448 = vmatpush1.bf16.msra.mxu0 0
    %1449 = vmatprep.subr.bf16.mxu0 0
    %1450 = vmatpush1.bf16.msra.mxu0 0
    %1451 = vmatprep.subr.bf16.mxu0 0
    %1452 = vmatpush1.bf16.msra.mxu0 0
    %1453 = vmatprep.subr.bf16.mxu0 0
    %1454 = vmatpush1.bf16.msra.mxu0 0
    %1455 = vmatprep.subr.bf16.mxu0 0
    %1456 = vmatpush1.bf16.msra.mxu0 0
    %1457 = vmatprep.subr.bf16.mxu0 0
    %1458 = vmatpush1.bf16.msra.mxu0 0
    %1459 = vmatprep.subr.bf16.mxu0 0
    %1460 = vmatpush1.bf16.msra.mxu0 0
    %1461 = vmatprep.subr.bf16.mxu0 0
    %1462 = vmatpush1.bf16.msra.mxu0 0
    %1463 = vmatprep.subr.bf16.mxu0 0
    %1464 = vmatpush1.bf16.msra.mxu0 0
    %1465 = vmatprep.subr.bf16.mxu0 0
    %1466 = vmatpush1.bf16.msra.mxu0 0
    %1467 = vmatprep.subr.bf16.mxu0 0
    %1468 = vmatpush1.bf16.msra.mxu0 0
    %1469 = vmatprep.subr.bf16.mxu0 0
    %1470 = vmatpush1.bf16.msra.mxu0 0
    %1471 = vmatprep.subr.bf16.mxu0 0
    %1472 = vmatpush1.bf16.msra.mxu0 0
    %1473 = vmatprep.subr.bf16.mxu0 0
    %1474 = vmatpush1.bf16.msra.mxu0 0
    %1475 = vmatprep.mubr.bf16.mxu0 0
    %1476 = vmatmul.mubr.bf16.gmra.mrb[0].mxu0 %v982
    %v1477 = vpop.f32.mrb[0].mxu0
    %v1478 = vadd.f32 0.0, %v1477
    %v1479 = vpop.f32.mrb[0].mxu0
    %v1480 = vpop.f32.mrb[0].mxu0
    %v1481 = vpop.f32.mrb[0].mxu0
    %1482 = vdwg.mxu0
    %v1484 = vsel %vm758, %v1223, 0
    %1486 = vmatprep.subr.bf16.mxu0 0
    %1487 = vmatpush1.bf16.msra.mxu0 %v1484
    %1488 = vmatprep.subr.bf16.mxu0 0
    %1489 = vmatpush1.bf16.msra.mxu0 0
    %1490 = vmatprep.subr.bf16.mxu0 0
    %1491 = vmatpush1.bf16.msra.mxu0 0
    %1492 = vmatprep.subr.bf16.mxu0 0
    %1493 = vmatpush1.bf16.msra.mxu0 0
    %1494 = vmatprep.subr.bf16.mxu0 0
    %1495 = vmatpush1.bf16.msra.mxu0 0
    %1496 = vmatprep.subr.bf16.mxu0 0
    %1497 = vmatpush1.bf16.msra.mxu0 0
    %1498 = vmatprep.subr.bf16.mxu0 0
    %1499 = vmatpush1.bf16.msra.mxu0 0
    %1500 = vmatprep.subr.bf16.mxu0 0
    %1501 = vmatpush1.bf16.msra.mxu0 0
    %1502 = vmatprep.subr.bf16.mxu0 0
    %1503 = vmatpush1.bf16.msra.mxu0 0
    %1504 = vmatprep.subr.bf16.mxu0 0
    %1505 = vmatpush1.bf16.msra.mxu0 0
    %1506 = vmatprep.subr.bf16.mxu0 0
    %1507 = vmatpush1.bf16.msra.mxu0 0
    %1508 = vmatprep.subr.bf16.mxu0 0
    %1509 = vmatpush1.bf16.msra.mxu0 0
    %1510 = vmatprep.subr.bf16.mxu0 0
    %1511 = vmatpush1.bf16.msra.mxu0 0
    %1512 = vmatprep.subr.bf16.mxu0 0
    %1513 = vmatpush1.bf16.msra.mxu0 0
    %1514 = vmatprep.subr.bf16.mxu0 0
    %1515 = vmatpush1.bf16.msra.mxu0 0
    %1516 = vmatprep.subr.bf16.mxu0 0
    %1517 = vmatpush1.bf16.msra.mxu0 0
    %1518 = vmatprep.mubr.bf16.mxu0 0
    %1519 = vmatmul.mubr.bf16.gmra.mrb[0].mxu0 %v1027
    %v1520 = vpop.f32.mrb[0].mxu0
    %v1521 = vadd.f32 0.0, %v1520
    %v1522 = vpop.f32.mrb[0].mxu0
    %v1523 = vpop.f32.mrb[0].mxu0
    %v1524 = vpop.f32.mrb[0].mxu0
    %1525 = vdwg.mxu0
    %v1527 = vsel %vm758, %v1224, 0
    %1529 = vmatprep.subr.bf16.mxu0 0
    %1530 = vmatpush1.bf16.msra.mxu0 %v1527
    %1531 = vmatprep.subr.bf16.mxu0 0
    %1532 = vmatpush1.bf16.msra.mxu0 0
    %1533 = vmatprep.subr.bf16.mxu0 0
    %1534 = vmatpush1.bf16.msra.mxu0 0
    %1535 = vmatprep.subr.bf16.mxu0 0
    %1536 = vmatpush1.bf16.msra.mxu0 0
    %1537 = vmatprep.subr.bf16.mxu0 0
    %1538 = vmatpush1.bf16.msra.mxu0 0
    %1539 = vmatprep.subr.bf16.mxu0 0
    %1540 = vmatpush1.bf16.msra.mxu0 0
    %1541 = vmatprep.subr.bf16.mxu0 0
    %1542 = vmatpush1.bf16.msra.mxu0 0
    %1543 = vmatprep.subr.bf16.mxu0 0
    %1544 = vmatpush1.bf16.msra.mxu0 0
    %1545 = vmatprep.subr.bf16.mxu0 0
    %1546 = vmatpush1.bf16.msra.mxu0 0
    %1547 = vmatprep.subr.bf16.mxu0 0
    %1548 = vmatpush1.bf16.msra.mxu0 0
    %1549 = vmatprep.subr.bf16.mxu0 0
    %1550 = vmatpush1.bf16.msra.mxu0 0
    %1551 = vmatprep.subr.bf16.mxu0 0
    %1552 = vmatpush1.bf16.msra.mxu0 0
    %1553 = vmatprep.subr.bf16.mxu0 0
    %1554 = vmatpush1.bf16.msra.mxu0 0
    %1555 = vmatprep.subr.bf16.mxu0 0
    %1556 = vmatpush1.bf16.msra.mxu0 0
    %1557 = vmatprep.subr.bf16.mxu0 0
    %1558 = vmatpush1.bf16.msra.mxu0 0
    %1559 = vmatprep.subr.bf16.mxu0 0
    %1560 = vmatpush1.bf16.msra.mxu0 0
    %1561 = vmatprep.mubr.bf16.mxu0 0
    %1562 = vmatmul.mubr.bf16.gmra.mrb[0].mxu0 %v1072
    %v1563 = vpop.f32.mrb[0].mxu0
    %v1564 = vadd.f32 0.0, %v1563
    %v1565 = vpop.f32.mrb[0].mxu0
    %v1566 = vpop.f32.mrb[0].mxu0
    %v1567 = vpop.f32.mrb[0].mxu0
    %1568 = vdwg.mxu0
    %v1569 = vpack.c.bf16 %v1263, %v1263
    %v1570 = vpack.c.bf16 %v1306, %v1306
    %v1571 = vpack.c.bf16 %v1349, %v1349
    %v1572 = vpack.c.bf16 %v1392, %v1392
    %v1573 = vpack.c.bf16 %v1435, %v1435
    %v1574 = vpack.c.bf16 %v1478, %v1478
    %v1575 = vpack.c.bf16 %v1521, %v1521
    %v1576 = vpack.c.bf16 %v1564, %v1564
    %v1585 = vunpack.c.l.b16 %v1569
    %v1586 = vunpack.c.l.b16 %v1570
    %v1587 = vunpack.c.l.b16 %v1571
    %v1588 = vunpack.c.l.b16 %v1572
    %v1589 = vunpack.c.l.b16 %v1573
    %v1590 = vunpack.c.l.b16 %v1574
    %v1591 = vunpack.c.l.b16 %v1575
    %v1592 = vunpack.c.l.b16 %v1576
    %v1593 = vrot.slane %v1586, 7
    %vm1594 = vcmask 1041409
    %v1595 = vsel %vm1594, %v1593, %v1585
    %v1596 = vrot.slane %v1587, 6
    %vm1597 = vcmask 1042434
    %v1598 = vsel %vm1597, %v1596, %v1595
    %v1599 = vrot.slane %v1588, 5
    %vm1600 = vcmask 1043459
    %v1601 = vsel %vm1600, %v1599, %v1598
    %v1602 = vrot.slane %v1589, 4
    %vm1603 = vcmask 1044484
    %v1604 = vsel %vm1603, %v1602, %v1601
    %v1605 = vrot.slane %v1590, 3
    %vm1606 = vcmask 1045509
    %v1607 = vsel %vm1606, %v1605, %v1604
    %v1608 = vrot.slane %v1591, 2
    %vm1609 = vcmask 1046534
    %v1610 = vsel %vm1609, %v1608, %v1607
    %v1611 = vrot.slane %v1592, 1
    %vm1612 = vcmask 1047559
    %v1613 = vsel %vm1612, %v1611, %v1610
    %v1614 = vpack.c.b16 %v1613, %v1613
    %v1619 = vunpack.c.l.b16 %v51
    %v1620 = vunpack.c.l.b16 %v52
    %v1621 = vunpack.c.l.b16 %v53
    %v1622 = vunpack.c.l.b16 %v54
    %v1623 = vpack.c.b16 %v1620, %v1619
    %v1624 = vpack.c.b16 %v1622, %v1621
    %v1628 = vsel %vm191, %v1614, 0
    %1630 = vmatprep.subr.bf16.mxu0 0
    %1631 = vmatpush1.bf16.msra.mxu0 %v1623
    %1632 = vmatprep.subr.bf16.mxu0 0
    %1633 = vmatpush1.bf16.msra.mxu0 %v1624
    %1634 = vmatprep.subr.bf16.mxu0 0
    %1635 = vmatpush1.bf16.msra.mxu0 0
    %1636 = vmatprep.subr.bf16.mxu0 0
    %1637 = vmatpush1.bf16.msra.mxu0 0
    %1638 = vmatprep.subr.bf16.mxu0 0
    %1639 = vmatpush1.bf16.msra.mxu0 0
    %1640 = vmatprep.subr.bf16.mxu0 0
    %1641 = vmatpush1.bf16.msra.mxu0 0
    %1642 = vmatprep.subr.bf16.mxu0 0
    %1643 = vmatpush1.bf16.msra.mxu0 0
    %1644 = vmatprep.subr.bf16.mxu0 0
    %1645 = vmatpush1.bf16.msra.mxu0 0
    %1646 = vmatprep.subr.bf16.mxu0 0
    %1647 = vmatpush1.bf16.msra.mxu0 0
    %1648 = vmatprep.subr.bf16.mxu0 0
    %1649 = vmatpush1.bf16.msra.mxu0 0
    %1650 = vmatprep.subr.bf16.mxu0 0
    %1651 = vmatpush1.bf16.msra.mxu0 0
    %1652 = vmatprep.subr.bf16.mxu0 0
    %1653 = vmatpush1.bf16.msra.mxu0 0
    %1654 = vmatprep.subr.bf16.mxu0 0
    %1655 = vmatpush1.bf16.msra.mxu0 0
    %1656 = vmatprep.subr.bf16.mxu0 0
    %1657 = vmatpush1.bf16.msra.mxu0 0
    %1658 = vmatprep.subr.bf16.mxu0 0
    %1659 = vmatpush1.bf16.msra.mxu0 0
    %1660 = vmatprep.subr.bf16.mxu0 0
    %1661 = vmatpush1.bf16.msra.mxu0 0
    %1662 = vmatprep.mubr.bf16.mxu0 0
    %1663 = vmatmul.mubr.bf16.gmra.mrb[0].mxu0 %v1628
    %v1664 = vpop.f32.mrb[0].mxu0
    %v1665 = vadd.f32 0.0, %v1664
    %v1666 = vpop.f32.mrb[0].mxu0
    %v1667 = vpop.f32.mrb[0].mxu0
    %v1668 = vpop.f32.mrb[0].mxu0
    %1669 = vdwg.mxu0
    %v1670 = vld [vmem:[#allocation2] sm:$0xf]
    %v1671 = vld [vmem:[#allocation2 + $0x4] sm:$0xf]
    %v1672 = vld [vmem:[#allocation2 + $0x8] sm:$0xf]
    %v1673 = vld [vmem:[#allocation2 + $0xc] sm:$0xf]
    %v1674 = vld [vmem:[#allocation2 + $0x10] sm:$0xf]
    %v1675 = vld [vmem:[#allocation2 + $0x14] sm:$0xf]
    %v1676 = vld [vmem:[#allocation2 + $0x18] sm:$0xf]
    %v1677 = vld [vmem:[#allocation2 + $0x1c] sm:$0xf]
    %v1678 = vld [vmem:[#allocation2 + $0x20] sm:$0xf]
    %v1679 = vld [vmem:[#allocation2 + $0x24] sm:$0xf]
    %v1680 = vld [vmem:[#allocation2 + $0x28] sm:$0xf]
    %v1681 = vld [vmem:[#allocation2 + $0x2c] sm:$0xf]
    %v1682 = vld [vmem:[#allocation2 + $0x30] sm:$0xf]
    %v1683 = vld [vmem:[#allocation2 + $0x34] sm:$0xf]
    %v1684 = vld [vmem:[#allocation2 + $0x38] sm:$0xf]
    %v1685 = vld [vmem:[#allocation2 + $0x3c] sm:$0xf]
    %v1686 = vld [vmem:[#allocation2 + $0x40] sm:$0xf]
    %v1687 = vld [vmem:[#allocation2 + $0x44] sm:$0xf]
    %v1688 = vld [vmem:[#allocation2 + $0x48] sm:$0xf]
    %v1689 = vld [vmem:[#allocation2 + $0x4c] sm:$0xf]
    %v1690 = vld [vmem:[#allocation2 + $0x50] sm:$0xf]
    %v1691 = vld [vmem:[#allocation2 + $0x54] sm:$0xf]
    %v1692 = vld [vmem:[#allocation2 + $0x58] sm:$0xf]
    %v1693 = vld [vmem:[#allocation2 + $0x5c] sm:$0xf]
    %v1694 = vld [vmem:[#allocation2 + $0x60] sm:$0xf]
    %v1695 = vld [vmem:[#allocation2 + $0x64] sm:$0xf]
    %v1696 = vld [vmem:[#allocation2 + $0x68] sm:$0xf]
    %v1697 = vld [vmem:[#allocation2 + $0x6c] sm:$0xf]
    %v1698 = vld [vmem:[#allocation2 + $0x70] sm:$0xf]
    %v1699 = vld [vmem:[#allocation2 + $0x74] sm:$0xf]
    %v1700 = vld [vmem:[#allocation2 + $0x78] sm:$0xf]
    %v1701 = vld [vmem:[#allocation2 + $0x7c] sm:$0xf]
    %v1702 = vld [vmem:[#allocation2 + $0x80] sm:$0xf]
    %v1703 = vld [vmem:[#allocation2 + $0x84] sm:$0xf]
    %v1704 = vld [vmem:[#allocation2 + $0x88] sm:$0xf]
    %v1705 = vld [vmem:[#allocation2 + $0x8c] sm:$0xf]
    %v1706 = vld [vmem:[#allocation2 + $0x90] sm:$0xf]
    %v1707 = vld [vmem:[#allocation2 + $0x94] sm:$0xf]
    %v1708 = vld [vmem:[#allocation2 + $0x98] sm:$0xf]
    %v1709 = vld [vmem:[#allocation2 + $0x9c] sm:$0xf]
    %v1710 = vld [vmem:[#allocation2 + $0xa0] sm:$0xf]
    %v1711 = vld [vmem:[#allocation2 + $0xa4] sm:$0xf]
    %v1712 = vld [vmem:[#allocation2 + $0xa8] sm:$0xf]
    %v1713 = vld [vmem:[#allocation2 + $0xac] sm:$0xf]
    %v1714 = vld [vmem:[#allocation2 + $0xb0] sm:$0xf]
    %v1715 = vld [vmem:[#allocation2 + $0xb4] sm:$0xf]
    %v1716 = vld [vmem:[#allocation2 + $0xb8] sm:$0xf]
    %v1717 = vld [vmem:[#allocation2 + $0xbc] sm:$0xf]
    %v1718 = vld [vmem:[#allocation2 + $0xc0] sm:$0xf]
    %v1719 = vld [vmem:[#allocation2 + $0xc4] sm:$0xf]
    %v1720 = vld [vmem:[#allocation2 + $0xc8] sm:$0xf]
    %v1721 = vld [vmem:[#allocation2 + $0xcc] sm:$0xf]
    %v1722 = vld [vmem:[%s3] sm:$0x1]
    %v1723 = vld [vmem:[%s3 + $0x8] sm:$0x1]
    %v1724 = vld [vmem:[%s3 + $0x10] sm:$0x1]
    %v1725 = vld [vmem:[%s3 + $0x18] sm:$0x1]
    %v1726 = vpack.c.bf16 %v1665, %v1665
    %v1727 = vlaneseq
    %v1728 = vshrl.u32 %v1727, 7
    %v1729 = vsub.s32 0, %v1728
    %v1730 = vrot.slane %v1722, %v1729
    %v1735 = vunpack.c.l.b16 %v1670
    %v1736 = vunpack.c.l.b16 %v1671
    %v1737 = vunpack.c.l.b16 %v1672
    %v1738 = vunpack.c.l.b16 %v1673
    %v1739 = vpack.c.b16 %v1736, %v1735
    %v1740 = vpack.c.b16 %v1738, %v1737
    %v1744 = vsel %vm191, %v1726, 0
    %1746 = vmatprep.subr.bf16.mxu0 0
    %1747 = vmatpush1.bf16.msra.mxu0 %v1739
    %1748 = vmatprep.subr.bf16.mxu0 0
    %1749 = vmatpush1.bf16.msra.mxu0 %v1740
    %1750 = vmatprep.subr.bf16.mxu0 0
    %1751 = vmatpush1.bf16.msra.mxu0 0
    %1752 = vmatprep.subr.bf16.mxu0 0
    %1753 = vmatpush1.bf16.msra.mxu0 0
    %1754 = vmatprep.subr.bf16.mxu0 0
    %1755 = vmatpush1.bf16.msra.mxu0 0
    %1756 = vmatprep.subr.bf16.mxu0 0
    %1757 = vmatpush1.bf16.msra.mxu0 0
    %1758 = vmatprep.subr.bf16.mxu0 0
    %1759 = vmatpush1.bf16.msra.mxu0 0
    %1760 = vmatprep.subr.bf16.mxu0 0
    %1761 = vmatpush1.bf16.msra.mxu0 0
    %1762 = vmatprep.subr.bf16.mxu0 0
    %1763 = vmatpush1.bf16.msra.mxu0 0
    %1764 = vmatprep.subr.bf16.mxu0 0
    %1765 = vmatpush1.bf16.msra.mxu0 0
    %1766 = vmatprep.subr.bf16.mxu0 0
    %1767 = vmatpush1.bf16.msra.mxu0 0
    %1768 = vmatprep.subr.bf16.mxu0 0
    %1769 = vmatpush1.bf16.msra.mxu0 0
    %1770 = vmatprep.subr.bf16.mxu0 0
    %1771 = vmatpush1.bf16.msra.mxu0 0
    %1772 = vmatprep.subr.bf16.mxu0 0
    %1773 = vmatpush1.bf16.msra.mxu0 0
    %1774 = vmatprep.subr.bf16.mxu0 0
    %1775 = vmatpush1.bf16.msra.mxu0 0
    %1776 = vmatprep.subr.bf16.mxu0 0
    %1777 = vmatpush1.bf16.msra.mxu0 0
    %1778 = vmatprep.mubr.bf16.mxu0 0
    %1779 = vmatmul.mubr.bf16.gmra.mrb[0].mxu0 %v1744
    %v1780 = vpop.f32.mrb[0].mxu0
    %v1781 = vadd.f32 %v1730, %v1780
    %v1782 = vpop.f32.mrb[0].mxu0
    %v1783 = vpop.f32.mrb[0].mxu0
    %v1784 = vpop.f32.mrb[0].mxu0
    %1785 = vdwg.mxu0
    %v1786 = vmax.f32 %v1781, 0.0
    %v1787 = vpack.c.bf16 %v1786, %v1786
    %v1788 = vlaneseq
    %v1789 = vshrl.u32 %v1788, 7
    %v1790 = vsub.s32 0, %v1789
    %v1791 = vrot.slane %v1723, %v1790
    %v1808 = vunpack.c.l.b16 %v1674
    %v1809 = vunpack.c.l.b16 %v1675
    %v1810 = vunpack.c.l.b16 %v1676
    %v1811 = vunpack.c.l.b16 %v1677
    %v1812 = vunpack.c.l.b16 %v1678
    %v1813 = vunpack.c.l.b16 %v1679
    %v1814 = vunpack.c.l.b16 %v1680
    %v1815 = vunpack.c.l.b16 %v1681
    %v1816 = vunpack.c.l.b16 %v1682
    %v1817 = vunpack.c.l.b16 %v1683
    %v1818 = vunpack.c.l.b16 %v1684
    %v1819 = vunpack.c.l.b16 %v1685
    %v1820 = vunpack.c.l.b16 %v1686
    %v1821 = vunpack.c.l.b16 %v1687
    %v1822 = vunpack.c.l.b16 %v1688
    %v1823 = vunpack.c.l.b16 %v1689
    %v1824 = vpack.c.b16 %v1809, %v1808
    %v1825 = vpack.c.b16 %v1811, %v1810
    %v1826 = vpack.c.b16 %v1813, %v1812
    %v1827 = vpack.c.b16 %v1815, %v1814
    %v1828 = vpack.c.b16 %v1817, %v1816
    %v1829 = vpack.c.b16 %v1819, %v1818
    %v1830 = vpack.c.b16 %v1821, %v1820
    %v1831 = vpack.c.b16 %v1823, %v1822
    %1840 = vmatprep.subr.bf16.mxu0 0
    %1841 = vmatpush1.bf16.msra.mxu0 %v1824
    %1842 = vmatprep.subr.bf16.mxu0 0
    %1843 = vmatpush1.bf16.msra.mxu0 %v1825
    %1844 = vmatprep.subr.bf16.mxu0 0
    %1845 = vmatpush1.bf16.msra.mxu0 %v1826
    %1846 = vmatprep.subr.bf16.mxu0 0
    %1847 = vmatpush1.bf16.msra.mxu0 %v1827
    %1848 = vmatprep.subr.bf16.mxu0 0
    %1849 = vmatpush1.bf16.msra.mxu0 %v1828
    %1850 = vmatprep.subr.bf16.mxu0 0
    %1851 = vmatpush1.bf16.msra.mxu0 %v1829
    %1852 = vmatprep.subr.bf16.mxu0 0
    %1853 = vmatpush1.bf16.msra.mxu0 %v1830
    %1854 = vmatprep.subr.bf16.mxu0 0
    %1855 = vmatpush1.bf16.msra.mxu0 %v1831
    %1856 = vmatprep.subr.bf16.mxu0 0
    %1857 = vmatpush1.bf16.msra.mxu0 0
    %1858 = vmatprep.subr.bf16.mxu0 0
    %1859 = vmatpush1.bf16.msra.mxu0 0
    %1860 = vmatprep.subr.bf16.mxu0 0
    %1861 = vmatpush1.bf16.msra.mxu0 0
    %1862 = vmatprep.subr.bf16.mxu0 0
    %1863 = vmatpush1.bf16.msra.mxu0 0
    %1864 = vmatprep.subr.bf16.mxu0 0
    %1865 = vmatpush1.bf16.msra.mxu0 0
    %1866 = vmatprep.subr.bf16.mxu0 0
    %1867 = vmatpush1.bf16.msra.mxu0 0
    %1868 = vmatprep.subr.bf16.mxu0 0
    %1869 = vmatpush1.bf16.msra.mxu0 0
    %1870 = vmatprep.subr.bf16.mxu0 0
    %1871 = vmatpush1.bf16.msra.mxu0 0
    %1872 = vmatprep.mubr.bf16.mxu0 0
    %1873 = vmatmul.mubr.bf16.gmra.mrb[0].mxu0 %v1787
    %v1874 = vpop.f32.mrb[0].mxu0
    %v1875 = vadd.f32 %v1791, %v1874
    %v1876 = vpop.f32.mrb[0].mxu0
    %v1877 = vpop.f32.mrb[0].mxu0
    %v1878 = vpop.f32.mrb[0].mxu0
    %1879 = vdwg.mxu0
    %v1880 = vmax.f32 %v1875, 0.0
    %v1881 = vpack.c.bf16 %v1880, %v1880
    %v1882 = vlaneseq
    %v1883 = vshrl.u32 %v1882, 7
    %v1884 = vsub.s32 0, %v1883
    %v1885 = vrot.slane %v1724, %v1884
    %v1902 = vunpack.c.l.b16 %v1690
    %v1903 = vunpack.c.l.b16 %v1691
    %v1904 = vunpack.c.l.b16 %v1692
    %v1905 = vunpack.c.l.b16 %v1693
    %v1906 = vunpack.c.l.b16 %v1694
    %v1907 = vunpack.c.l.b16 %v1695
    %v1908 = vunpack.c.l.b16 %v1696
    %v1909 = vunpack.c.l.b16 %v1697
    %v1910 = vunpack.c.l.b16 %v1698
    %v1911 = vunpack.c.l.b16 %v1699
    %v1912 = vunpack.c.l.b16 %v1700
    %v1913 = vunpack.c.l.b16 %v1701
    %v1914 = vunpack.c.l.b16 %v1702
    %v1915 = vunpack.c.l.b16 %v1703
    %v1916 = vunpack.c.l.b16 %v1704
    %v1917 = vunpack.c.l.b16 %v1705
    %v1918 = vpack.c.b16 %v1903, %v1902
    %v1919 = vpack.c.b16 %v1905, %v1904
    %v1920 = vpack.c.b16 %v1907, %v1906
    %v1921 = vpack.c.b16 %v1909, %v1908
    %v1922 = vpack.c.b16 %v1911, %v1910
    %v1923 = vpack.c.b16 %v1913, %v1912
    %v1924 = vpack.c.b16 %v1915, %v1914
    %v1925 = vpack.c.b16 %v1917, %v1916
    %1934 = vmatprep.subr.bf16.mxu0 0
    %1935 = vmatpush1.bf16.msra.mxu0 %v1918
    %1936 = vmatprep.subr.bf16.mxu0 0
    %1937 = vmatpush1.bf16.msra.mxu0 %v1919
    %1938 = vmatprep.subr.bf16.mxu0 0
    %1939 = vmatpush1.bf16.msra.mxu0 %v1920
    %1940 = vmatprep.subr.bf16.mxu0 0
    %1941 = vmatpush1.bf16.msra.mxu0 %v1921
    %1942 = vmatprep.subr.bf16.mxu0 0
    %1943 = vmatpush1.bf16.msra.mxu0 %v1922
    %1944 = vmatprep.subr.bf16.mxu0 0
    %1945 = vmatpush1.bf16.msra.mxu0 %v1923
    %1946 = vmatprep.subr.bf16.mxu0 0
    %1947 = vmatpush1.bf16.msra.mxu0 %v1924
    %1948 = vmatprep.subr.bf16.mxu0 0
    %1949 = vmatpush1.bf16.msra.mxu0 %v1925
    %1950 = vmatprep.subr.bf16.mxu0 0
    %1951 = vmatpush1.bf16.msra.mxu0 0
    %1952 = vmatprep.subr.bf16.mxu0 0
    %1953 = vmatpush1.bf16.msra.mxu0 0
    %1954 = vmatprep.subr.bf16.mxu0 0
    %1955 = vmatpush1.bf16.msra.mxu0 0
    %1956 = vmatprep.subr.bf16.mxu0 0
    %1957 = vmatpush1.bf16.msra.mxu0 0
    %1958 = vmatprep.subr.bf16.mxu0 0
    %1959 = vmatpush1.bf16.msra.mxu0 0
    %1960 = vmatprep.subr.bf16.mxu0 0
    %1961 = vmatpush1.bf16.msra.mxu0 0
    %1962 = vmatprep.subr.bf16.mxu0 0
    %1963 = vmatpush1.bf16.msra.mxu0 0
    %1964 = vmatprep.subr.bf16.mxu0 0
    %1965 = vmatpush1.bf16.msra.mxu0 0
    %1966 = vmatprep.mubr.bf16.mxu0 0
    %1967 = vmatmul.mubr.bf16.gmra.mrb[0].mxu0 %v1881
    %v1968 = vpop.f32.mrb[0].mxu0
    %v1969 = vadd.f32 %v1885, %v1968
    %v1970 = vpop.f32.mrb[0].mxu0
    %v1971 = vpop.f32.mrb[0].mxu0
    %v1972 = vpop.f32.mrb[0].mxu0
    %1973 = vdwg.mxu0
    %v1974 = vmax.f32 %v1969, 0.0
    %v1975 = vpack.c.bf16 %v1974, %v1974
    %v1976 = vlaneseq
    %v1977 = vshrl.u32 %v1976, 7
    %v1978 = vsub.s32 0, %v1977
    %v1979 = vrot.slane %v1725, %v1978
    %v1996 = vunpack.c.l.b16 %v1706
    %v1997 = vunpack.c.l.b16 %v1707
    %v1998 = vunpack.c.l.b16 %v1708
    %v1999 = vunpack.c.l.b16 %v1709
    %v2000 = vunpack.c.l.b16 %v1710
    %v2001 = vunpack.c.l.b16 %v1711
    %v2002 = vunpack.c.l.b16 %v1712
    %v2003 = vunpack.c.l.b16 %v1713
    %v2004 = vunpack.c.l.b16 %v1714
    %v2005 = vunpack.c.l.b16 %v1715
    %v2006 = vunpack.c.l.b16 %v1716
    %v2007 = vunpack.c.l.b16 %v1717
    %v2008 = vunpack.c.l.b16 %v1718
    %v2009 = vunpack.c.l.b16 %v1719
    %v2010 = vunpack.c.l.b16 %v1720
    %v2011 = vunpack.c.l.b16 %v1721
    %v2012 = vpack.c.b16 %v1997, %v1996
    %v2013 = vpack.c.b16 %v1999, %v1998
    %v2014 = vpack.c.b16 %v2001, %v2000
    %v2015 = vpack.c.b16 %v2003, %v2002
    %v2016 = vpack.c.b16 %v2005, %v2004
    %v2017 = vpack.c.b16 %v2007, %v2006
    %v2018 = vpack.c.b16 %v2009, %v2008
    %v2019 = vpack.c.b16 %v2011, %v2010
    %2028 = vmatprep.subr.bf16.mxu0 0
    %2029 = vmatpush1.bf16.msra.mxu0 %v2012
    %2030 = vmatprep.subr.bf16.mxu0 0
    %2031 = vmatpush1.bf16.msra.mxu0 %v2013
    %2032 = vmatprep.subr.bf16.mxu0 0
    %2033 = vmatpush1.bf16.msra.mxu0 %v2014
    %2034 = vmatprep.subr.bf16.mxu0 0
    %2035 = vmatpush1.bf16.msra.mxu0 %v2015
    %2036 = vmatprep.subr.bf16.mxu0 0
    %2037 = vmatpush1.bf16.msra.mxu0 %v2016
    %2038 = vmatprep.subr.bf16.mxu0 0
    %2039 = vmatpush1.bf16.msra.mxu0 %v2017
    %2040 = vmatprep.subr.bf16.mxu0 0
    %2041 = vmatpush1.bf16.msra.mxu0 %v2018
    %2042 = vmatprep.subr.bf16.mxu0 0
    %2043 = vmatpush1.bf16.msra.mxu0 %v2019
    %2044 = vmatprep.subr.bf16.mxu0 0
    %2045 = vmatpush1.bf16.msra.mxu0 0
    %2046 = vmatprep.subr.bf16.mxu0 0
    %2047 = vmatpush1.bf16.msra.mxu0 0
    %2048 = vmatprep.subr.bf16.mxu0 0
    %2049 = vmatpush1.bf16.msra.mxu0 0
    %2050 = vmatprep.subr.bf16.mxu0 0
    %2051 = vmatpush1.bf16.msra.mxu0 0
    %2052 = vmatprep.subr.bf16.mxu0 0
    %2053 = vmatpush1.bf16.msra.mxu0 0
    %2054 = vmatprep.subr.bf16.mxu0 0
    %2055 = vmatpush1.bf16.msra.mxu0 0
    %2056 = vmatprep.subr.bf16.mxu0 0
    %2057 = vmatpush1.bf16.msra.mxu0 0
    %2058 = vmatprep.subr.bf16.mxu0 0
    %2059 = vmatpush1.bf16.msra.mxu0 0
    %2060 = vmatprep.mubr.bf16.mxu0 0
    %2061 = vmatmul.mubr.bf16.gmra.mrb[0].mxu0 %v1975
    %v2062 = vpop.f32.mrb[0].mxu0
    %v2063 = vadd.f32 %v1979, %v2062
    %v2064 = vpop.f32.mrb[0].mxu0
    %v2065 = vpop.f32.mrb[0].mxu0
    %v2066 = vpop.f32.mrb[0].mxu0
    %2067 = vdwg.mxu0
    %2068 = vst [vmem:[#allocation5] sm:$0xff] %v2063
    // Predicated region
    $region22: #{tpu_custom_call.1} parent=1 // pred_check
      _
    $region23: #{tpu_custom_call.1} parent=1 // pred_check_branch
      %2070 = sbr.rel (0) target = $region25
    $region24: #{tpu_custom_call.1} parent=1 // pred_region
      %s2072 = ssub.s32 128, 128
      %2073 = vsyncadd [#allocation4], %s2072
      %s2075 = sshll.u32 [#allocation5], 4
      %s2076 = int_to_ptr.vmem [resolvable:$true] %s2075
      %2078 = dma.vmem_to_hbm [thread:$0]  %s2076, 128, %s4, [#allocation4]
    $region25: #{tpu_custom_call.1} parent=1 // pred_fallthru
      _
    // Predicated region
    $region26: #{tpu_custom_call.1} parent=1 // pred_check
      _
    $region27: #{tpu_custom_call.1} parent=1 // pred_check_branch
      %2080 = sbr.rel (0) target = $region29
    $region28: #{tpu_custom_call.1} parent=1 // pred_region
      %2081 = dma.done [#allocation4], 128
    $region29: #{tpu_custom_call.1} parent=1 // pred_fallthru
      _
    %2082 = vsyncpa [#allocation3], 1
    %2083 = vsyncpa [#allocation4], 1

</llo_original>
